<compile_context>
chip_gen: v5e
topology: v5e:2x2
jax: 0.10.0
libtpu: 0.0.40
codegen_flags: <defaults>
</compile_context>

<pallas_src>
import jax
import jax.numpy as jnp
from jax.experimental import pallas as pl
from jax.experimental.pallas import tpu as pltpu

DIMS = [(8, 6), (6, 4), (4, 2), (2, 1)]   # (in, out) per layer
N_IN = 8          # input feature width
LANE = 128        # batch rows per lane group
SUB_CHUNK = 16    # sublane rows per inner-loop chunk (16 * 128 = 2048 batch rows)
TS_MAX = 512      # sublane rows per grid block      (512 * 128 = 65536 batch rows)
N_PARAMS = sum(din * dout + dout for din, dout in DIMS)   # 95


def _round_up(a, b):
    return -(-a // b) * b


def mlp_kernel(wb_ref, x_ref, o_ref):
    # wb_ref: SMEM (95,) f32  -- per layer: weight (out, in) row-major, then bias
    # x_ref : VMEM (8, TS, 128) f32 -- feature-major, batch on the (TS, 128) plane
    # o_ref : VMEM (TS, 128) f32    -- lane-dense output block
    ts = o_ref.shape[0]
    n_chunks = ts // SUB_CHUNK          # static Python int (ts is a multiple of SUB_CHUNK)

    @pl.loop(0, n_chunks)
    def _(c):
        base = pl.multiple_of(c * SUB_CHUNK, SUB_CHUNK)
        # Dense per-feature tiles: (SUB_CHUNK, 128) each, full vreg utilization.
        rows = [x_ref[f, pl.ds(base, SUB_CHUNK), :] for f in range(N_IN)]
        off = 0
        for (din, dout) in DIMS:
            w_off, b_off = off, off + din * dout
            new_rows = []
            for j in range(dout):
                # z_j = sum_i w[i, j] * h_i + b_j  -- scalar-broadcast VPU FMAs
                acc = rows[0] * wb_ref[w_off + j * din]
                for i in range(1, din):
                    acc = acc + rows[i] * wb_ref[w_off + j * din + i]
                new_rows.append(jax.nn.sigmoid(acc + wb_ref[b_off + j]))
            rows = new_rows
            off = b_off + dout
        o_ref[pl.ds(base, SUB_CHUNK), :] = rows[0]


def pack_params(params):
    """One-time packing: flatten all layers into a single (95,) f32 vector.
    Per layer: weight stored (out, in) row-major, then bias."""
    pieces = []
    for (w, b) in params:                       # w: (din, dout), b: (dout,)
        pieces.append(jnp.asarray(w, jnp.float32).T.reshape(-1))
        pieces.append(jnp.asarray(b, jnp.float32).reshape(-1))
    return jnp.concatenate(pieces)


def mlp_forward(x, wb):
    """x: (batch, 8) float32.  wb: (95,) packed params.  Returns (batch, 1) float32."""
    assert x.shape[1] == N_IN
    batch = x.shape[0]
    s_needed = -(-batch // LANE)                         # ceil(batch / 128)
    s_min = _round_up(s_needed, SUB_CHUNK)
    if s_min <= TS_MAX:
        # Whole batch in one or two blocks; prefer 2 equal blocks (v7x: 2 TCs).
        if s_min >= 2 * SUB_CHUNK and s_min % (2 * SUB_CHUNK) == 0:
            ts = s_min // 2
        else:
            ts = s_min
        s_pad = s_min
    else:
        ts = TS_MAX
        s_pad = _round_up(s_min, TS_MAX)
    grid = (s_pad // ts,)

    # One-time layout change (single pass): (batch, 8) -> (8, S, 128) feature-major,
    # zero-padded so the kernel never reads uninitialized rows.
    bp = s_pad * LANE
    xt = (jnp.zeros((N_IN, bp), jnp.float32)
             .at[:, :batch].set(x.astype(jnp.float32).T)
             .reshape(N_IN, s_pad, LANE))

    out = pl.pallas_call(
        mlp_kernel,
        out_shape=jax.ShapeDtypeStruct((s_pad, LANE), jnp.float32),
        grid_spec=pltpu.PrefetchScalarGridSpec(
            num_scalar_prefetch=1,                       # wb -> SMEM scalars
            grid=grid,
            in_specs=[pl.BlockSpec((N_IN, ts, LANE), lambda i, wb_ref: (0, i, 0))],
            out_specs=pl.BlockSpec((ts, LANE), lambda i, wb_ref: (i, 0)),
        ),
        compiler_params=pltpu.CompilerParams(
            dimension_semantics=("parallel",)),
    )(wb, xt)

    # Lane-dense kernel output -> (batch, 1); contiguous reshape + slice, free.
    return out.reshape(bp, 1)[:batch]


def init_params(key):
    """Deterministic init matching nn.Linear shapes (stored as (in, out))."""
    params = []
    for (din, dout) in DIMS:
        key, kw, kb = jax.random.split(key, 3)
        bound = 1.0 / jnp.sqrt(din)
        w = jax.random.uniform(kw, (din, dout), jnp.float32, -bound, bound)
        b = jax.random.uniform(kb, (dout,), jnp.float32, -bound, bound)
        params.append((w, b))
    return params


def reference_forward(x, params):
    h = x
    for (w, b) in params:
        h = jax.nn.sigmoid(h @ w + b)
    return h


if __name__ == "__main__":
    key = jax.random.PRNGKey(0)
    kx, kp = jax.random.split(key)
    batch = 16
    x = jax.random.normal(kx, (batch, N_IN), jnp.float32)
    params = init_params(kp)

    wb = pack_params(params)        # one-time packing outside the hot path

    out = mlp_forward(x, wb)
    out = jax.block_until_ready(out)

    ref = reference_forward(x, params)
    assert out.shape == (batch, 1)
    assert jnp.allclose(out, ref, atol=1e-5, rtol=1e-5)
    print("KERNEL_OK")
</pallas_src>

<mosaic_0001>
module attributes {stable_mosaic.version = 11 : i64} {
  func.func @mlp_kernel(%arg0: i32, %arg1: memref<95xf32, #tpu.memory_space<smem>>, %arg2: memref<8x16x128xf32, #tpu.memory_space<vmem>>, %arg3: memref<16x128xf32, #tpu.memory_space<vmem>>) attributes {dimension_semantics = [#tpu.dimension_semantics<parallel>], iteration_bounds = array<i64: 1>, scalar_prefetch = 1 : i64, scratch_operands = 0 : i64, tpu.core_type = #tpu.core_type<tc>, window_params = [{transform_indices = @transform_0, window_bounds = array<i64: 8, 16, 128>}, {transform_indices = @transform_1, window_bounds = array<i64: 16, 128>}]} {
    %c0_i32 = arith.constant 0 : i32
    %c1_i32 = arith.constant 1 : i32
    %0 = arith.muli %c0_i32, %c1_i32 : i32
    %c0_i32_0 = arith.constant 0 : i32
    %1 = arith.addi %c0_i32_0, %0 : i32
    %c16_i32 = arith.constant 16 : i32
    %2 = arith.muli %1, %c16_i32 : i32
    %3 = tpu.assume_multiple %2, 16 : i32
    %c0 = arith.constant 0 : index
    %4 = arith.index_cast %3 : i32 to index
    %c0_1 = arith.constant 0 : index
    %5 = vector.load %arg2[%c0, %4, %c0_1] : memref<8x16x128xf32, #tpu.memory_space<vmem>>, vector<1x16x128xf32>
    %6 = vector.shape_cast %5 : vector<1x16x128xf32> to vector<16x128xf32>
    %c1 = arith.constant 1 : index
    %7 = arith.index_cast %3 : i32 to index
    %c0_2 = arith.constant 0 : index
    %8 = vector.load %arg2[%c1, %7, %c0_2] : memref<8x16x128xf32, #tpu.memory_space<vmem>>, vector<1x16x128xf32>
    %9 = vector.shape_cast %8 : vector<1x16x128xf32> to vector<16x128xf32>
    %c2 = arith.constant 2 : index
    %10 = arith.index_cast %3 : i32 to index
    %c0_3 = arith.constant 0 : index
    %11 = vector.load %arg2[%c2, %10, %c0_3] : memref<8x16x128xf32, #tpu.memory_space<vmem>>, vector<1x16x128xf32>
    %12 = vector.shape_cast %11 : vector<1x16x128xf32> to vector<16x128xf32>
    %c3 = arith.constant 3 : index
    %13 = arith.index_cast %3 : i32 to index
    %c0_4 = arith.constant 0 : index
    %14 = vector.load %arg2[%c3, %13, %c0_4] : memref<8x16x128xf32, #tpu.memory_space<vmem>>, vector<1x16x128xf32>
    %15 = vector.shape_cast %14 : vector<1x16x128xf32> to vector<16x128xf32>
    %c4 = arith.constant 4 : index
    %16 = arith.index_cast %3 : i32 to index
    %c0_5 = arith.constant 0 : index
    %17 = vector.load %arg2[%c4, %16, %c0_5] : memref<8x16x128xf32, #tpu.memory_space<vmem>>, vector<1x16x128xf32>
    %18 = vector.shape_cast %17 : vector<1x16x128xf32> to vector<16x128xf32>
    %c5 = arith.constant 5 : index
    %19 = arith.index_cast %3 : i32 to index
    %c0_6 = arith.constant 0 : index
    %20 = vector.load %arg2[%c5, %19, %c0_6] : memref<8x16x128xf32, #tpu.memory_space<vmem>>, vector<1x16x128xf32>
    %21 = vector.shape_cast %20 : vector<1x16x128xf32> to vector<16x128xf32>
    %c6 = arith.constant 6 : index
    %22 = arith.index_cast %3 : i32 to index
    %c0_7 = arith.constant 0 : index
    %23 = vector.load %arg2[%c6, %22, %c0_7] : memref<8x16x128xf32, #tpu.memory_space<vmem>>, vector<1x16x128xf32>
    %24 = vector.shape_cast %23 : vector<1x16x128xf32> to vector<16x128xf32>
    %c7 = arith.constant 7 : index
    %25 = arith.index_cast %3 : i32 to index
    %c0_8 = arith.constant 0 : index
    %26 = vector.load %arg2[%c7, %25, %c0_8] : memref<8x16x128xf32, #tpu.memory_space<vmem>>, vector<1x16x128xf32>
    %27 = vector.shape_cast %26 : vector<1x16x128xf32> to vector<16x128xf32>
    %c0_9 = arith.constant 0 : index
    %28 = memref.load %arg1[%c0_9] : memref<95xf32, #tpu.memory_space<smem>>
    %29 = vector.broadcast %28 : f32 to vector<16x128xf32>
    %30 = arith.mulf %6, %29 : vector<16x128xf32>
    %c1_10 = arith.constant 1 : index
    %31 = memref.load %arg1[%c1_10] : memref<95xf32, #tpu.memory_space<smem>>
    %32 = vector.broadcast %31 : f32 to vector<16x128xf32>
    %33 = arith.mulf %9, %32 : vector<16x128xf32>
    %34 = arith.addf %30, %33 : vector<16x128xf32>
    %c2_11 = arith.constant 2 : index
    %35 = memref.load %arg1[%c2_11] : memref<95xf32, #tpu.memory_space<smem>>
    %36 = vector.broadcast %35 : f32 to vector<16x128xf32>
    %37 = arith.mulf %12, %36 : vector<16x128xf32>
    %38 = arith.addf %34, %37 : vector<16x128xf32>
    %c3_12 = arith.constant 3 : index
    %39 = memref.load %arg1[%c3_12] : memref<95xf32, #tpu.memory_space<smem>>
    %40 = vector.broadcast %39 : f32 to vector<16x128xf32>
    %41 = arith.mulf %15, %40 : vector<16x128xf32>
    %42 = arith.addf %38, %41 : vector<16x128xf32>
    %c4_13 = arith.constant 4 : index
    %43 = memref.load %arg1[%c4_13] : memref<95xf32, #tpu.memory_space<smem>>
    %44 = vector.broadcast %43 : f32 to vector<16x128xf32>
    %45 = arith.mulf %18, %44 : vector<16x128xf32>
    %46 = arith.addf %42, %45 : vector<16x128xf32>
    %c5_14 = arith.constant 5 : index
    %47 = memref.load %arg1[%c5_14] : memref<95xf32, #tpu.memory_space<smem>>
    %48 = vector.broadcast %47 : f32 to vector<16x128xf32>
    %49 = arith.mulf %21, %48 : vector<16x128xf32>
    %50 = arith.addf %46, %49 : vector<16x128xf32>
    %c6_15 = arith.constant 6 : index
    %51 = memref.load %arg1[%c6_15] : memref<95xf32, #tpu.memory_space<smem>>
    %52 = vector.broadcast %51 : f32 to vector<16x128xf32>
    %53 = arith.mulf %24, %52 : vector<16x128xf32>
    %54 = arith.addf %50, %53 : vector<16x128xf32>
    %c7_16 = arith.constant 7 : index
    %55 = memref.load %arg1[%c7_16] : memref<95xf32, #tpu.memory_space<smem>>
    %56 = vector.broadcast %55 : f32 to vector<16x128xf32>
    %57 = arith.mulf %27, %56 : vector<16x128xf32>
    %58 = arith.addf %54, %57 : vector<16x128xf32>
    %c48 = arith.constant 48 : index
    %59 = memref.load %arg1[%c48] : memref<95xf32, #tpu.memory_space<smem>>
    %60 = vector.broadcast %59 : f32 to vector<16x128xf32>
    %61 = arith.addf %58, %60 : vector<16x128xf32>
    %62 = arith.negf %61 : vector<16x128xf32>
    %63 = math.exp %62 : vector<16x128xf32>
    %cst = arith.constant 1.000000e+00 : f32
    %64 = vector.broadcast %cst : f32 to vector<16x128xf32>
    %65 = arith.addf %64, %63 : vector<16x128xf32>
    %66 = arith.divf %64, %65 : vector<16x128xf32>
    %c8 = arith.constant 8 : index
    %67 = memref.load %arg1[%c8] : memref<95xf32, #tpu.memory_space<smem>>
    %68 = vector.broadcast %67 : f32 to vector<16x128xf32>
    %69 = arith.mulf %6, %68 : vector<16x128xf32>
    %c9 = arith.constant 9 : index
    %70 = memref.load %arg1[%c9] : memref<95xf32, #tpu.memory_space<smem>>
    %71 = vector.broadcast %70 : f32 to vector<16x128xf32>
    %72 = arith.mulf %9, %71 : vector<16x128xf32>
    %73 = arith.addf %69, %72 : vector<16x128xf32>
    %c10 = arith.constant 10 : index
    %74 = memref.load %arg1[%c10] : memref<95xf32, #tpu.memory_space<smem>>
    %75 = vector.broadcast %74 : f32 to vector<16x128xf32>
    %76 = arith.mulf %12, %75 : vector<16x128xf32>
    %77 = arith.addf %73, %76 : vector<16x128xf32>
    %c11 = arith.constant 11 : index
    %78 = memref.load %arg1[%c11] : memref<95xf32, #tpu.memory_space<smem>>
    %79 = vector.broadcast %78 : f32 to vector<16x128xf32>
    %80 = arith.mulf %15, %79 : vector<16x128xf32>
    %81 = arith.addf %77, %80 : vector<16x128xf32>
    %c12 = arith.constant 12 : index
    %82 = memref.load %arg1[%c12] : memref<95xf32, #tpu.memory_space<smem>>
    %83 = vector.broadcast %82 : f32 to vector<16x128xf32>
    %84 = arith.mulf %18, %83 : vector<16x128xf32>
    %85 = arith.addf %81, %84 : vector<16x128xf32>
    %c13 = arith.constant 13 : index
    %86 = memref.load %arg1[%c13] : memref<95xf32, #tpu.memory_space<smem>>
    %87 = vector.broadcast %86 : f32 to vector<16x128xf32>
    %88 = arith.mulf %21, %87 : vector<16x128xf32>
    %89 = arith.addf %85, %88 : vector<16x128xf32>
    %c14 = arith.constant 14 : index
    %90 = memref.load %arg1[%c14] : memref<95xf32, #tpu.memory_space<smem>>
    %91 = vector.broadcast %90 : f32 to vector<16x128xf32>
    %92 = arith.mulf %24, %91 : vector<16x128xf32>
    %93 = arith.addf %89, %92 : vector<16x128xf32>
    %c15 = arith.constant 15 : index
    %94 = memref.load %arg1[%c15] : memref<95xf32, #tpu.memory_space<smem>>
    %95 = vector.broadcast %94 : f32 to vector<16x128xf32>
    %96 = arith.mulf %27, %95 : vector<16x128xf32>
    %97 = arith.addf %93, %96 : vector<16x128xf32>
    %c49 = arith.constant 49 : index
    %98 = memref.load %arg1[%c49] : memref<95xf32, #tpu.memory_space<smem>>
    %99 = vector.broadcast %98 : f32 to vector<16x128xf32>
    %100 = arith.addf %97, %99 : vector<16x128xf32>
    %101 = arith.negf %100 : vector<16x128xf32>
    %102 = math.exp %101 : vector<16x128xf32>
    %cst_17 = arith.constant 1.000000e+00 : f32
    %103 = vector.broadcast %cst_17 : f32 to vector<16x128xf32>
    %104 = arith.addf %103, %102 : vector<16x128xf32>
    %105 = arith.divf %103, %104 : vector<16x128xf32>
    %c16 = arith.constant 16 : index
    %106 = memref.load %arg1[%c16] : memref<95xf32, #tpu.memory_space<smem>>
    %107 = vector.broadcast %106 : f32 to vector<16x128xf32>
    %108 = arith.mulf %6, %107 : vector<16x128xf32>
    %c17 = arith.constant 17 : index
    %109 = memref.load %arg1[%c17] : memref<95xf32, #tpu.memory_space<smem>>
    %110 = vector.broadcast %109 : f32 to vector<16x128xf32>
    %111 = arith.mulf %9, %110 : vector<16x128xf32>
    %112 = arith.addf %108, %111 : vector<16x128xf32>
    %c18 = arith.constant 18 : index
    %113 = memref.load %arg1[%c18] : memref<95xf32, #tpu.memory_space<smem>>
    %114 = vector.broadcast %113 : f32 to vector<16x128xf32>
    %115 = arith.mulf %12, %114 : vector<16x128xf32>
    %116 = arith.addf %112, %115 : vector<16x128xf32>
    %c19 = arith.constant 19 : index
    %117 = memref.load %arg1[%c19] : memref<95xf32, #tpu.memory_space<smem>>
    %118 = vector.broadcast %117 : f32 to vector<16x128xf32>
    %119 = arith.mulf %15, %118 : vector<16x128xf32>
    %120 = arith.addf %116, %119 : vector<16x128xf32>
    %c20 = arith.constant 20 : index
    %121 = memref.load %arg1[%c20] : memref<95xf32, #tpu.memory_space<smem>>
    %122 = vector.broadcast %121 : f32 to vector<16x128xf32>
    %123 = arith.mulf %18, %122 : vector<16x128xf32>
    %124 = arith.addf %120, %123 : vector<16x128xf32>
    %c21 = arith.constant 21 : index
    %125 = memref.load %arg1[%c21] : memref<95xf32, #tpu.memory_space<smem>>
    %126 = vector.broadcast %125 : f32 to vector<16x128xf32>
    %127 = arith.mulf %21, %126 : vector<16x128xf32>
    %128 = arith.addf %124, %127 : vector<16x128xf32>
    %c22 = arith.constant 22 : index
    %129 = memref.load %arg1[%c22] : memref<95xf32, #tpu.memory_space<smem>>
    %130 = vector.broadcast %129 : f32 to vector<16x128xf32>
    %131 = arith.mulf %24, %130 : vector<16x128xf32>
    %132 = arith.addf %128, %131 : vector<16x128xf32>
    %c23 = arith.constant 23 : index
    %133 = memref.load %arg1[%c23] : memref<95xf32, #tpu.memory_space<smem>>
    %134 = vector.broadcast %133 : f32 to vector<16x128xf32>
    %135 = arith.mulf %27, %134 : vector<16x128xf32>
    %136 = arith.addf %132, %135 : vector<16x128xf32>
    %c50 = arith.constant 50 : index
    %137 = memref.load %arg1[%c50] : memref<95xf32, #tpu.memory_space<smem>>
    %138 = vector.broadcast %137 : f32 to vector<16x128xf32>
    %139 = arith.addf %136, %138 : vector<16x128xf32>
    %140 = arith.negf %139 : vector<16x128xf32>
    %141 = math.exp %140 : vector<16x128xf32>
    %cst_18 = arith.constant 1.000000e+00 : f32
    %142 = vector.broadcast %cst_18 : f32 to vector<16x128xf32>
    %143 = arith.addf %142, %141 : vector<16x128xf32>
    %144 = arith.divf %142, %143 : vector<16x128xf32>
    %c24 = arith.constant 24 : index
    %145 = memref.load %arg1[%c24] : memref<95xf32, #tpu.memory_space<smem>>
    %146 = vector.broadcast %145 : f32 to vector<16x128xf32>
    %147 = arith.mulf %6, %146 : vector<16x128xf32>
    %c25 = arith.constant 25 : index
    %148 = memref.load %arg1[%c25] : memref<95xf32, #tpu.memory_space<smem>>
    %149 = vector.broadcast %148 : f32 to vector<16x128xf32>
    %150 = arith.mulf %9, %149 : vector<16x128xf32>
    %151 = arith.addf %147, %150 : vector<16x128xf32>
    %c26 = arith.constant 26 : index
    %152 = memref.load %arg1[%c26] : memref<95xf32, #tpu.memory_space<smem>>
    %153 = vector.broadcast %152 : f32 to vector<16x128xf32>
    %154 = arith.mulf %12, %153 : vector<16x128xf32>
    %155 = arith.addf %151, %154 : vector<16x128xf32>
    %c27 = arith.constant 27 : index
    %156 = memref.load %arg1[%c27] : memref<95xf32, #tpu.memory_space<smem>>
    %157 = vector.broadcast %156 : f32 to vector<16x128xf32>
    %158 = arith.mulf %15, %157 : vector<16x128xf32>
    %159 = arith.addf %155, %158 : vector<16x128xf32>
    %c28 = arith.constant 28 : index
    %160 = memref.load %arg1[%c28] : memref<95xf32, #tpu.memory_space<smem>>
    %161 = vector.broadcast %160 : f32 to vector<16x128xf32>
    %162 = arith.mulf %18, %161 : vector<16x128xf32>
    %163 = arith.addf %159, %162 : vector<16x128xf32>
    %c29 = arith.constant 29 : index
    %164 = memref.load %arg1[%c29] : memref<95xf32, #tpu.memory_space<smem>>
    %165 = vector.broadcast %164 : f32 to vector<16x128xf32>
    %166 = arith.mulf %21, %165 : vector<16x128xf32>
    %167 = arith.addf %163, %166 : vector<16x128xf32>
    %c30 = arith.constant 30 : index
    %168 = memref.load %arg1[%c30] : memref<95xf32, #tpu.memory_space<smem>>
    %169 = vector.broadcast %168 : f32 to vector<16x128xf32>
    %170 = arith.mulf %24, %169 : vector<16x128xf32>
    %171 = arith.addf %167, %170 : vector<16x128xf32>
    %c31 = arith.constant 31 : index
    %172 = memref.load %arg1[%c31] : memref<95xf32, #tpu.memory_space<smem>>
    %173 = vector.broadcast %172 : f32 to vector<16x128xf32>
    %174 = arith.mulf %27, %173 : vector<16x128xf32>
    %175 = arith.addf %171, %174 : vector<16x128xf32>
    %c51 = arith.constant 51 : index
    %176 = memref.load %arg1[%c51] : memref<95xf32, #tpu.memory_space<smem>>
    %177 = vector.broadcast %176 : f32 to vector<16x128xf32>
    %178 = arith.addf %175, %177 : vector<16x128xf32>
    %179 = arith.negf %178 : vector<16x128xf32>
    %180 = math.exp %179 : vector<16x128xf32>
    %cst_19 = arith.constant 1.000000e+00 : f32
    %181 = vector.broadcast %cst_19 : f32 to vector<16x128xf32>
    %182 = arith.addf %181, %180 : vector<16x128xf32>
    %183 = arith.divf %181, %182 : vector<16x128xf32>
    %c32 = arith.constant 32 : index
    %184 = memref.load %arg1[%c32] : memref<95xf32, #tpu.memory_space<smem>>
    %185 = vector.broadcast %184 : f32 to vector<16x128xf32>
    %186 = arith.mulf %6, %185 : vector<16x128xf32>
    %c33 = arith.constant 33 : index
    %187 = memref.load %arg1[%c33] : memref<95xf32, #tpu.memory_space<smem>>
    %188 = vector.broadcast %187 : f32 to vector<16x128xf32>
    %189 = arith.mulf %9, %188 : vector<16x128xf32>
    %190 = arith.addf %186, %189 : vector<16x128xf32>
    %c34 = arith.constant 34 : index
    %191 = memref.load %arg1[%c34] : memref<95xf32, #tpu.memory_space<smem>>
    %192 = vector.broadcast %191 : f32 to vector<16x128xf32>
    %193 = arith.mulf %12, %192 : vector<16x128xf32>
    %194 = arith.addf %190, %193 : vector<16x128xf32>
    %c35 = arith.constant 35 : index
    %195 = memref.load %arg1[%c35] : memref<95xf32, #tpu.memory_space<smem>>
    %196 = vector.broadcast %195 : f32 to vector<16x128xf32>
    %197 = arith.mulf %15, %196 : vector<16x128xf32>
    %198 = arith.addf %194, %197 : vector<16x128xf32>
    %c36 = arith.constant 36 : index
    %199 = memref.load %arg1[%c36] : memref<95xf32, #tpu.memory_space<smem>>
    %200 = vector.broadcast %199 : f32 to vector<16x128xf32>
    %201 = arith.mulf %18, %200 : vector<16x128xf32>
    %202 = arith.addf %198, %201 : vector<16x128xf32>
    %c37 = arith.constant 37 : index
    %203 = memref.load %arg1[%c37] : memref<95xf32, #tpu.memory_space<smem>>
    %204 = vector.broadcast %203 : f32 to vector<16x128xf32>
    %205 = arith.mulf %21, %204 : vector<16x128xf32>
    %206 = arith.addf %202, %205 : vector<16x128xf32>
    %c38 = arith.constant 38 : index
    %207 = memref.load %arg1[%c38] : memref<95xf32, #tpu.memory_space<smem>>
    %208 = vector.broadcast %207 : f32 to vector<16x128xf32>
    %209 = arith.mulf %24, %208 : vector<16x128xf32>
    %210 = arith.addf %206, %209 : vector<16x128xf32>
    %c39 = arith.constant 39 : index
    %211 = memref.load %arg1[%c39] : memref<95xf32, #tpu.memory_space<smem>>
    %212 = vector.broadcast %211 : f32 to vector<16x128xf32>
    %213 = arith.mulf %27, %212 : vector<16x128xf32>
    %214 = arith.addf %210, %213 : vector<16x128xf32>
    %c52 = arith.constant 52 : index
    %215 = memref.load %arg1[%c52] : memref<95xf32, #tpu.memory_space<smem>>
    %216 = vector.broadcast %215 : f32 to vector<16x128xf32>
    %217 = arith.addf %214, %216 : vector<16x128xf32>
    %218 = arith.negf %217 : vector<16x128xf32>
    %219 = math.exp %218 : vector<16x128xf32>
    %cst_20 = arith.constant 1.000000e+00 : f32
    %220 = vector.broadcast %cst_20 : f32 to vector<16x128xf32>
    %221 = arith.addf %220, %219 : vector<16x128xf32>
    %222 = arith.divf %220, %221 : vector<16x128xf32>
    %c40 = arith.constant 40 : index
    %223 = memref.load %arg1[%c40] : memref<95xf32, #tpu.memory_space<smem>>
    %224 = vector.broadcast %223 : f32 to vector<16x128xf32>
    %225 = arith.mulf %6, %224 : vector<16x128xf32>
    %c41 = arith.constant 41 : index
    %226 = memref.load %arg1[%c41] : memref<95xf32, #tpu.memory_space<smem>>
    %227 = vector.broadcast %226 : f32 to vector<16x128xf32>
    %228 = arith.mulf %9, %227 : vector<16x128xf32>
    %229 = arith.addf %225, %228 : vector<16x128xf32>
    %c42 = arith.constant 42 : index
    %230 = memref.load %arg1[%c42] : memref<95xf32, #tpu.memory_space<smem>>
    %231 = vector.broadcast %230 : f32 to vector<16x128xf32>
    %232 = arith.mulf %12, %231 : vector<16x128xf32>
    %233 = arith.addf %229, %232 : vector<16x128xf32>
    %c43 = arith.constant 43 : index
    %234 = memref.load %arg1[%c43] : memref<95xf32, #tpu.memory_space<smem>>
    %235 = vector.broadcast %234 : f32 to vector<16x128xf32>
    %236 = arith.mulf %15, %235 : vector<16x128xf32>
    %237 = arith.addf %233, %236 : vector<16x128xf32>
    %c44 = arith.constant 44 : index
    %238 = memref.load %arg1[%c44] : memref<95xf32, #tpu.memory_space<smem>>
    %239 = vector.broadcast %238 : f32 to vector<16x128xf32>
    %240 = arith.mulf %18, %239 : vector<16x128xf32>
    %241 = arith.addf %237, %240 : vector<16x128xf32>
    %c45 = arith.constant 45 : index
    %242 = memref.load %arg1[%c45] : memref<95xf32, #tpu.memory_space<smem>>
    %243 = vector.broadcast %242 : f32 to vector<16x128xf32>
    %244 = arith.mulf %21, %243 : vector<16x128xf32>
    %245 = arith.addf %241, %244 : vector<16x128xf32>
    %c46 = arith.constant 46 : index
    %246 = memref.load %arg1[%c46] : memref<95xf32, #tpu.memory_space<smem>>
    %247 = vector.broadcast %246 : f32 to vector<16x128xf32>
    %248 = arith.mulf %24, %247 : vector<16x128xf32>
    %249 = arith.addf %245, %248 : vector<16x128xf32>
    %c47 = arith.constant 47 : index
    %250 = memref.load %arg1[%c47] : memref<95xf32, #tpu.memory_space<smem>>
    %251 = vector.broadcast %250 : f32 to vector<16x128xf32>
    %252 = arith.mulf %27, %251 : vector<16x128xf32>
    %253 = arith.addf %249, %252 : vector<16x128xf32>
    %c53 = arith.constant 53 : index
    %254 = memref.load %arg1[%c53] : memref<95xf32, #tpu.memory_space<smem>>
    %255 = vector.broadcast %254 : f32 to vector<16x128xf32>
    %256 = arith.addf %253, %255 : vector<16x128xf32>
    %257 = arith.negf %256 : vector<16x128xf32>
    %258 = math.exp %257 : vector<16x128xf32>
    %cst_21 = arith.constant 1.000000e+00 : f32
    %259 = vector.broadcast %cst_21 : f32 to vector<16x128xf32>
    %260 = arith.addf %259, %258 : vector<16x128xf32>
    %261 = arith.divf %259, %260 : vector<16x128xf32>
    %c54 = arith.constant 54 : index
    %262 = memref.load %arg1[%c54] : memref<95xf32, #tpu.memory_space<smem>>
    %263 = vector.broadcast %262 : f32 to vector<16x128xf32>
    %264 = arith.mulf %66, %263 : vector<16x128xf32>
    %c55 = arith.constant 55 : index
    %265 = memref.load %arg1[%c55] : memref<95xf32, #tpu.memory_space<smem>>
    %266 = vector.broadcast %265 : f32 to vector<16x128xf32>
    %267 = arith.mulf %105, %266 : vector<16x128xf32>
    %268 = arith.addf %264, %267 : vector<16x128xf32>
    %c56 = arith.constant 56 : index
    %269 = memref.load %arg1[%c56] : memref<95xf32, #tpu.memory_space<smem>>
    %270 = vector.broadcast %269 : f32 to vector<16x128xf32>
    %271 = arith.mulf %144, %270 : vector<16x128xf32>
    %272 = arith.addf %268, %271 : vector<16x128xf32>
    %c57 = arith.constant 57 : index
    %273 = memref.load %arg1[%c57] : memref<95xf32, #tpu.memory_space<smem>>
    %274 = vector.broadcast %273 : f32 to vector<16x128xf32>
    %275 = arith.mulf %183, %274 : vector<16x128xf32>
    %276 = arith.addf %272, %275 : vector<16x128xf32>
    %c58 = arith.constant 58 : index
    %277 = memref.load %arg1[%c58] : memref<95xf32, #tpu.memory_space<smem>>
    %278 = vector.broadcast %277 : f32 to vector<16x128xf32>
    %279 = arith.mulf %222, %278 : vector<16x128xf32>
    %280 = arith.addf %276, %279 : vector<16x128xf32>
    %c59 = arith.constant 59 : index
    %281 = memref.load %arg1[%c59] : memref<95xf32, #tpu.memory_space<smem>>
    %282 = vector.broadcast %281 : f32 to vector<16x128xf32>
    %283 = arith.mulf %261, %282 : vector<16x128xf32>
    %284 = arith.addf %280, %283 : vector<16x128xf32>
    %c78 = arith.constant 78 : index
    %285 = memref.load %arg1[%c78] : memref<95xf32, #tpu.memory_space<smem>>
    %286 = vector.broadcast %285 : f32 to vector<16x128xf32>
    %287 = arith.addf %284, %286 : vector<16x128xf32>
    %288 = arith.negf %287 : vector<16x128xf32>
    %289 = math.exp %288 : vector<16x128xf32>
    %cst_22 = arith.constant 1.000000e+00 : f32
    %290 = vector.broadcast %cst_22 : f32 to vector<16x128xf32>
    %291 = arith.addf %290, %289 : vector<16x128xf32>
    %292 = arith.divf %290, %291 : vector<16x128xf32>
    %c60 = arith.constant 60 : index
    %293 = memref.load %arg1[%c60] : memref<95xf32, #tpu.memory_space<smem>>
    %294 = vector.broadcast %293 : f32 to vector<16x128xf32>
    %295 = arith.mulf %66, %294 : vector<16x128xf32>
    %c61 = arith.constant 61 : index
    %296 = memref.load %arg1[%c61] : memref<95xf32, #tpu.memory_space<smem>>
    %297 = vector.broadcast %296 : f32 to vector<16x128xf32>
    %298 = arith.mulf %105, %297 : vector<16x128xf32>
    %299 = arith.addf %295, %298 : vector<16x128xf32>
    %c62 = arith.constant 62 : index
    %300 = memref.load %arg1[%c62] : memref<95xf32, #tpu.memory_space<smem>>
    %301 = vector.broadcast %300 : f32 to vector<16x128xf32>
    %302 = arith.mulf %144, %301 : vector<16x128xf32>
    %303 = arith.addf %299, %302 : vector<16x128xf32>
    %c63 = arith.constant 63 : index
    %304 = memref.load %arg1[%c63] : memref<95xf32, #tpu.memory_space<smem>>
    %305 = vector.broadcast %304 : f32 to vector<16x128xf32>
    %306 = arith.mulf %183, %305 : vector<16x128xf32>
    %307 = arith.addf %303, %306 : vector<16x128xf32>
    %c64 = arith.constant 64 : index
    %308 = memref.load %arg1[%c64] : memref<95xf32, #tpu.memory_space<smem>>
    %309 = vector.broadcast %308 : f32 to vector<16x128xf32>
    %310 = arith.mulf %222, %309 : vector<16x128xf32>
    %311 = arith.addf %307, %310 : vector<16x128xf32>
    %c65 = arith.constant 65 : index
    %312 = memref.load %arg1[%c65] : memref<95xf32, #tpu.memory_space<smem>>
    %313 = vector.broadcast %312 : f32 to vector<16x128xf32>
    %314 = arith.mulf %261, %313 : vector<16x128xf32>
    %315 = arith.addf %311, %314 : vector<16x128xf32>
    %c79 = arith.constant 79 : index
    %316 = memref.load %arg1[%c79] : memref<95xf32, #tpu.memory_space<smem>>
    %317 = vector.broadcast %316 : f32 to vector<16x128xf32>
    %318 = arith.addf %315, %317 : vector<16x128xf32>
    %319 = arith.negf %318 : vector<16x128xf32>
    %320 = math.exp %319 : vector<16x128xf32>
    %cst_23 = arith.constant 1.000000e+00 : f32
    %321 = vector.broadcast %cst_23 : f32 to vector<16x128xf32>
    %322 = arith.addf %321, %320 : vector<16x128xf32>
    %323 = arith.divf %321, %322 : vector<16x128xf32>
    %c66 = arith.constant 66 : index
    %324 = memref.load %arg1[%c66] : memref<95xf32, #tpu.memory_space<smem>>
    %325 = vector.broadcast %324 : f32 to vector<16x128xf32>
    %326 = arith.mulf %66, %325 : vector<16x128xf32>
    %c67 = arith.constant 67 : index
    %327 = memref.load %arg1[%c67] : memref<95xf32, #tpu.memory_space<smem>>
    %328 = vector.broadcast %327 : f32 to vector<16x128xf32>
    %329 = arith.mulf %105, %328 : vector<16x128xf32>
    %330 = arith.addf %326, %329 : vector<16x128xf32>
    %c68 = arith.constant 68 : index
    %331 = memref.load %arg1[%c68] : memref<95xf32, #tpu.memory_space<smem>>
    %332 = vector.broadcast %331 : f32 to vector<16x128xf32>
    %333 = arith.mulf %144, %332 : vector<16x128xf32>
    %334 = arith.addf %330, %333 : vector<16x128xf32>
    %c69 = arith.constant 69 : index
    %335 = memref.load %arg1[%c69] : memref<95xf32, #tpu.memory_space<smem>>
    %336 = vector.broadcast %335 : f32 to vector<16x128xf32>
    %337 = arith.mulf %183, %336 : vector<16x128xf32>
    %338 = arith.addf %334, %337 : vector<16x128xf32>
    %c70 = arith.constant 70 : index
    %339 = memref.load %arg1[%c70] : memref<95xf32, #tpu.memory_space<smem>>
    %340 = vector.broadcast %339 : f32 to vector<16x128xf32>
    %341 = arith.mulf %222, %340 : vector<16x128xf32>
    %342 = arith.addf %338, %341 : vector<16x128xf32>
    %c71 = arith.constant 71 : index
    %343 = memref.load %arg1[%c71] : memref<95xf32, #tpu.memory_space<smem>>
    %344 = vector.broadcast %343 : f32 to vector<16x128xf32>
    %345 = arith.mulf %261, %344 : vector<16x128xf32>
    %346 = arith.addf %342, %345 : vector<16x128xf32>
    %c80 = arith.constant 80 : index
    %347 = memref.load %arg1[%c80] : memref<95xf32, #tpu.memory_space<smem>>
    %348 = vector.broadcast %347 : f32 to vector<16x128xf32>
    %349 = arith.addf %346, %348 : vector<16x128xf32>
    %350 = arith.negf %349 : vector<16x128xf32>
    %351 = math.exp %350 : vector<16x128xf32>
    %cst_24 = arith.constant 1.000000e+00 : f32
    %352 = vector.broadcast %cst_24 : f32 to vector<16x128xf32>
    %353 = arith.addf %352, %351 : vector<16x128xf32>
    %354 = arith.divf %352, %353 : vector<16x128xf32>
    %c72 = arith.constant 72 : index
    %355 = memref.load %arg1[%c72] : memref<95xf32, #tpu.memory_space<smem>>
    %356 = vector.broadcast %355 : f32 to vector<16x128xf32>
    %357 = arith.mulf %66, %356 : vector<16x128xf32>
    %c73 = arith.constant 73 : index
    %358 = memref.load %arg1[%c73] : memref<95xf32, #tpu.memory_space<smem>>
    %359 = vector.broadcast %358 : f32 to vector<16x128xf32>
    %360 = arith.mulf %105, %359 : vector<16x128xf32>
    %361 = arith.addf %357, %360 : vector<16x128xf32>
    %c74 = arith.constant 74 : index
    %362 = memref.load %arg1[%c74] : memref<95xf32, #tpu.memory_space<smem>>
    %363 = vector.broadcast %362 : f32 to vector<16x128xf32>
    %364 = arith.mulf %144, %363 : vector<16x128xf32>
    %365 = arith.addf %361, %364 : vector<16x128xf32>
    %c75 = arith.constant 75 : index
    %366 = memref.load %arg1[%c75] : memref<95xf32, #tpu.memory_space<smem>>
    %367 = vector.broadcast %366 : f32 to vector<16x128xf32>
    %368 = arith.mulf %183, %367 : vector<16x128xf32>
    %369 = arith.addf %365, %368 : vector<16x128xf32>
    %c76 = arith.constant 76 : index
    %370 = memref.load %arg1[%c76] : memref<95xf32, #tpu.memory_space<smem>>
    %371 = vector.broadcast %370 : f32 to vector<16x128xf32>
    %372 = arith.mulf %222, %371 : vector<16x128xf32>
    %373 = arith.addf %369, %372 : vector<16x128xf32>
    %c77 = arith.constant 77 : index
    %374 = memref.load %arg1[%c77] : memref<95xf32, #tpu.memory_space<smem>>
    %375 = vector.broadcast %374 : f32 to vector<16x128xf32>
    %376 = arith.mulf %261, %375 : vector<16x128xf32>
    %377 = arith.addf %373, %376 : vector<16x128xf32>
    %c81 = arith.constant 81 : index
    %378 = memref.load %arg1[%c81] : memref<95xf32, #tpu.memory_space<smem>>
    %379 = vector.broadcast %378 : f32 to vector<16x128xf32>
    %380 = arith.addf %377, %379 : vector<16x128xf32>
    %381 = arith.negf %380 : vector<16x128xf32>
    %382 = math.exp %381 : vector<16x128xf32>
    %cst_25 = arith.constant 1.000000e+00 : f32
    %383 = vector.broadcast %cst_25 : f32 to vector<16x128xf32>
    %384 = arith.addf %383, %382 : vector<16x128xf32>
    %385 = arith.divf %383, %384 : vector<16x128xf32>
    %c82 = arith.constant 82 : index
    %386 = memref.load %arg1[%c82] : memref<95xf32, #tpu.memory_space<smem>>
    %387 = vector.broadcast %386 : f32 to vector<16x128xf32>
    %388 = arith.mulf %292, %387 : vector<16x128xf32>
    %c83 = arith.constant 83 : index
    %389 = memref.load %arg1[%c83] : memref<95xf32, #tpu.memory_space<smem>>
    %390 = vector.broadcast %389 : f32 to vector<16x128xf32>
    %391 = arith.mulf %323, %390 : vector<16x128xf32>
    %392 = arith.addf %388, %391 : vector<16x128xf32>
    %c84 = arith.constant 84 : index
    %393 = memref.load %arg1[%c84] : memref<95xf32, #tpu.memory_space<smem>>
    %394 = vector.broadcast %393 : f32 to vector<16x128xf32>
    %395 = arith.mulf %354, %394 : vector<16x128xf32>
    %396 = arith.addf %392, %395 : vector<16x128xf32>
    %c85 = arith.constant 85 : index
    %397 = memref.load %arg1[%c85] : memref<95xf32, #tpu.memory_space<smem>>
    %398 = vector.broadcast %397 : f32 to vector<16x128xf32>
    %399 = arith.mulf %385, %398 : vector<16x128xf32>
    %400 = arith.addf %396, %399 : vector<16x128xf32>
    %c90 = arith.constant 90 : index
    %401 = memref.load %arg1[%c90] : memref<95xf32, #tpu.memory_space<smem>>
    %402 = vector.broadcast %401 : f32 to vector<16x128xf32>
    %403 = arith.addf %400, %402 : vector<16x128xf32>
    %404 = arith.negf %403 : vector<16x128xf32>
    %405 = math.exp %404 : vector<16x128xf32>
    %cst_26 = arith.constant 1.000000e+00 : f32
    %406 = vector.broadcast %cst_26 : f32 to vector<16x128xf32>
    %407 = arith.addf %406, %405 : vector<16x128xf32>
    %408 = arith.divf %406, %407 : vector<16x128xf32>
    %c86 = arith.constant 86 : index
    %409 = memref.load %arg1[%c86] : memref<95xf32, #tpu.memory_space<smem>>
    %410 = vector.broadcast %409 : f32 to vector<16x128xf32>
    %411 = arith.mulf %292, %410 : vector<16x128xf32>
    %c87 = arith.constant 87 : index
    %412 = memref.load %arg1[%c87] : memref<95xf32, #tpu.memory_space<smem>>
    %413 = vector.broadcast %412 : f32 to vector<16x128xf32>
    %414 = arith.mulf %323, %413 : vector<16x128xf32>
    %415 = arith.addf %411, %414 : vector<16x128xf32>
    %c88 = arith.constant 88 : index
    %416 = memref.load %arg1[%c88] : memref<95xf32, #tpu.memory_space<smem>>
    %417 = vector.broadcast %416 : f32 to vector<16x128xf32>
    %418 = arith.mulf %354, %417 : vector<16x128xf32>
    %419 = arith.addf %415, %418 : vector<16x128xf32>
    %c89 = arith.constant 89 : index
    %420 = memref.load %arg1[%c89] : memref<95xf32, #tpu.memory_space<smem>>
    %421 = vector.broadcast %420 : f32 to vector<16x128xf32>
    %422 = arith.mulf %385, %421 : vector<16x128xf32>
    %423 = arith.addf %419, %422 : vector<16x128xf32>
    %c91 = arith.constant 91 : index
    %424 = memref.load %arg1[%c91] : memref<95xf32, #tpu.memory_space<smem>>
    %425 = vector.broadcast %424 : f32 to vector<16x128xf32>
    %426 = arith.addf %423, %425 : vector<16x128xf32>
    %427 = arith.negf %426 : vector<16x128xf32>
    %428 = math.exp %427 : vector<16x128xf32>
    %cst_27 = arith.constant 1.000000e+00 : f32
    %429 = vector.broadcast %cst_27 : f32 to vector<16x128xf32>
    %430 = arith.addf %429, %428 : vector<16x128xf32>
    %431 = arith.divf %429, %430 : vector<16x128xf32>
    %c92 = arith.constant 92 : index
    %432 = memref.load %arg1[%c92] : memref<95xf32, #tpu.memory_space<smem>>
    %433 = vector.broadcast %432 : f32 to vector<16x128xf32>
    %434 = arith.mulf %408, %433 : vector<16x128xf32>
    %c93 = arith.constant 93 : index
    %435 = memref.load %arg1[%c93] : memref<95xf32, #tpu.memory_space<smem>>
    %436 = vector.broadcast %435 : f32 to vector<16x128xf32>
    %437 = arith.mulf %431, %436 : vector<16x128xf32>
    %438 = arith.addf %434, %437 : vector<16x128xf32>
    %c94 = arith.constant 94 : index
    %439 = memref.load %arg1[%c94] : memref<95xf32, #tpu.memory_space<smem>>
    %440 = vector.broadcast %439 : f32 to vector<16x128xf32>
    %441 = arith.addf %438, %440 : vector<16x128xf32>
    %442 = arith.negf %441 : vector<16x128xf32>
    %443 = math.exp %442 : vector<16x128xf32>
    %cst_28 = arith.constant 1.000000e+00 : f32
    %444 = vector.broadcast %cst_28 : f32 to vector<16x128xf32>
    %445 = arith.addf %444, %443 : vector<16x128xf32>
    %446 = arith.divf %444, %445 : vector<16x128xf32>
    %447 = arith.index_cast %3 : i32 to index
    %c0_29 = arith.constant 0 : index
    %448 = vector.load %arg3[%447, %c0_29] : memref<16x128xf32, #tpu.memory_space<vmem>>, vector<16x128xf32>
    tpu.vector_store %arg3[%447, %c0_29], %446 {strides = array<i32>} : memref<16x128xf32, #tpu.memory_space<vmem>>, vector<16x128xf32>,
    %c1_i32_30 = arith.constant 1 : i32
    return
  }
  func.func @transform_0(%arg0: i32, %arg1: memref<95xf32, #tpu.memory_space<smem>>) -> (i32, i32, i32) {
    %c0_i32 = arith.constant 0 : i32
    %c0_i32_0 = arith.constant 0 : i32
    %c0_i32_1 = arith.constant 0 : i32
    return %c0_i32, %arg0, %c0_i32_0 : i32, i32, i32
  }
  func.func @transform_1(%arg0: i32, %arg1: memref<95xf32, #tpu.memory_space<smem>>) -> (i32, i32) {
    %c0_i32 = arith.constant 0 : i32
    %c0_i32_0 = arith.constant 0 : i32
    return %arg0, %c0_i32 : i32, i32
  }
}

</mosaic_0001>

<llo_original>
// kernel: tpu_custom_call.1
$region0: #{tpu_custom_call.1}
  #allocation0 [shape = 'u32[]', space=smem, size = 0x4, offset = 0x4, fixed_abs, tag = 'smem constant byte address 0x4 - core index']
  #allocation1 [shape = 'u32[72,128]{1,0:T(1,128)}', space=vmem, size = 0x9000, scoped, tag = 'internal scratch']
  #allocation2 [shape = 's32[1]{0}', space=sflag, size = 0x4, scoped, tag = 'scoped memory for tpu_custom_call.1']
  #allocation3 [shape = 'u8[512]{0}', space=smem, size = 0x200, scoped, tag = 'prefetched SMEM operand 0']
  %s0 = inlined_call_operand.hbm [shape: f32[95], index: 0, kind: input, shape index: {}]
  %s1 = inlined_call_operand.hbm [shape: f32[8,16,128], index: 1, kind: input, shape index: {}]
  %s2 = inlined_call_operand.hbm [shape: f32[16,128], index: 2, kind: output, shape index: {}]
  %s3 = sld [smem:[#allocation0]]
  $region18: #{tpu_custom_call.1} parent=0
    _
  %s5 = ssub.s32 1, %s3
  %s6 = scalar_select 0, %s5, %s3
  %s8 = sshll.u32 %s0, 4
  %s9 = int_to_ptr.hbm [resolvable:$true] %s8
  %11 = dma.hbm_to_smem %s9, 16, [#allocation3], [#allocation2]
  %13 = dma.done [#allocation2], 16
  %14 = sfence
  $region1: #{tpu_custom_call.1} parent=0
    #allocation4 [shape = 'u8[65536]{0}', space=vmem, size = 0x10000, scoped, tag = 'input window, operand 1, single buffered']
    #allocation5 [shape = 's32[1]{0}', space=sflag, size = 0x4, scoped, tag = 'scoped memory for tpu_custom_call.1']
    #allocation6 [shape = 's32[1]{0}', space=sflag, size = 0x4, scoped, tag = 'scoped memory for tpu_custom_call.1']
    #allocation7 [shape = 'u8[8192]{0}', space=vmem, size = 0x2000, scoped, tag = 'output window, operand 0, single buffered']
    %15 = vsyncpa [#allocation5], 0
    %16 = vsyncpa [#allocation6], 0
    // Predicated region
    $region2: #{tpu_custom_call.1} parent=1 // pred_check
      _
    $region3: #{tpu_custom_call.1} parent=1 // pred_check_branch
      %18 = sbr.rel (0) target = $region5
    $region4: #{tpu_custom_call.1} parent=1 // pred_region
      %20 = vsyncadd [#allocation5], 0
      %s21 = sshll.u32 %s1, 4
      %s22 = int_to_ptr.hbm [resolvable:$true] %s21
      %s23 = sshll.u32 [#allocation4], 4
      %s24 = int_to_ptr.vmem [resolvable:$true] %s23
      %29 = dma.hbm_to_vmem [thread:$0]  %s22, 2048, %s24, [#allocation5], 128, 128, 8
    $region5: #{tpu_custom_call.1} parent=1 // pred_fallthru
      _
    // Predicated region
    $region6: #{tpu_custom_call.1} parent=1 // pred_check
      _
    $region7: #{tpu_custom_call.1} parent=1 // pred_check_branch
      %31 = sbr.rel (0) target = $region9
    $region8: #{tpu_custom_call.1} parent=1 // pred_region
      %33 = dma.done [#allocation5], 2048
    $region9: #{tpu_custom_call.1} parent=1 // pred_fallthru
      _
    %v34 = vld [vmem:[#allocation4] sm:$0xff]
    %v35 = vld [vmem:[#allocation4 + $0x8] sm:$0xff]
    %s36 = sadd.s32 0, 16
    %s37 = scalar_lea.vmem [#allocation4], %s36
    %v38 = vld [vmem:[%s37] sm:$0xff]
    %v39 = vld [vmem:[%s37 + $0x8] sm:$0xff]
    %s40 = sadd.s32 0, 32
    %s41 = scalar_lea.vmem [#allocation4], %s40
    %v42 = vld [vmem:[%s41] sm:$0xff]
    %v43 = vld [vmem:[%s41 + $0x8] sm:$0xff]
    %s44 = sadd.s32 0, 48
    %s45 = scalar_lea.vmem [#allocation4], %s44
    %v46 = vld [vmem:[%s45] sm:$0xff]
    %v47 = vld [vmem:[%s45 + $0x8] sm:$0xff]
    %s48 = sadd.s32 0, 64
    %s49 = scalar_lea.vmem [#allocation4], %s48
    %v50 = vld [vmem:[%s49] sm:$0xff]
    %v51 = vld [vmem:[%s49 + $0x8] sm:$0xff]
    %s52 = sadd.s32 0, 80
    %s53 = scalar_lea.vmem [#allocation4], %s52
    %v54 = vld [vmem:[%s53] sm:$0xff]
    %v55 = vld [vmem:[%s53 + $0x8] sm:$0xff]
    %s56 = sadd.s32 0, 96
    %s57 = scalar_lea.vmem [#allocation4], %s56
    %v58 = vld [vmem:[%s57] sm:$0xff]
    %v59 = vld [vmem:[%s57 + $0x8] sm:$0xff]
    %s60 = sadd.s32 0, 112
    %s61 = scalar_lea.vmem [#allocation4], %s60
    %v62 = vld [vmem:[%s61] sm:$0xff]
    %v63 = vld [vmem:[%s61 + $0x8] sm:$0xff]
    %s64 = sld [smem:[#allocation3]]
    %v65 = vstv %s64
    %v66 = vmul.f32 %v34, %v65
    %v67 = vmul.f32 %v35, %v65
    %s68 = sld [smem:[#allocation3 + $0x1]]
    %v69 = vstv %s68
    %v70 = vmul.f32 %v38, %v69
    %v71 = vmul.f32 %v39, %v69
    %v72 = vadd.f32 %v66, %v70
    %v73 = vadd.f32 %v67, %v71
    %s74 = sld [smem:[#allocation3 + $0x2]]
    %v75 = vstv %s74
    %v76 = vmul.f32 %v42, %v75
    %v77 = vmul.f32 %v43, %v75
    %v78 = vadd.f32 %v72, %v76
    %v79 = vadd.f32 %v73, %v77
    %s80 = sld [smem:[#allocation3 + $0x3]]
    %v81 = vstv %s80
    %v82 = vmul.f32 %v46, %v81
    %v83 = vmul.f32 %v47, %v81
    %v84 = vadd.f32 %v78, %v82
    %v85 = vadd.f32 %v79, %v83
    %s86 = sld [smem:[#allocation3 + $0x4]]
    %v87 = vstv %s86
    %v88 = vmul.f32 %v50, %v87
    %v89 = vmul.f32 %v51, %v87
    %v90 = vadd.f32 %v84, %v88
    %v91 = vadd.f32 %v85, %v89
    %s92 = sld [smem:[#allocation3 + $0x5]]
    %v93 = vstv %s92
    %v94 = vmul.f32 %v54, %v93
    %v95 = vmul.f32 %v55, %v93
    %v96 = vadd.f32 %v90, %v94
    %v97 = vadd.f32 %v91, %v95
    %s98 = sld [smem:[#allocation3 + $0x6]]
    %v99 = vstv %s98
    %v100 = vmul.f32 %v58, %v99
    %v101 = vmul.f32 %v59, %v99
    %v102 = vadd.f32 %v96, %v100
    %v103 = vadd.f32 %v97, %v101
    %s104 = sld [smem:[#allocation3 + $0x7]]
    %v105 = vstv %s104
    %v106 = vmul.f32 %v62, %v105
    %v107 = vmul.f32 %v63, %v105
    %v108 = vadd.f32 %v102, %v106
    %v109 = vadd.f32 %v103, %v107
    %s110 = sld [smem:[#allocation3 + $0x30]]
    %v111 = vstv %s110
    %v112 = vadd.f32 %v108, %v111
    %v113 = vadd.f32 %v109, %v111
    %v114 = vxor.u32 %v112, 2147483648
    %v115 = vxor.u32 %v113, 2147483648
    %v116 = vmul.f32 %v114, 1.442695
    %v117 = vpow.pop %v116
    %v118 = vmul.f32 %v115, 1.442695
    %v119 = vpow.pop %v118
    %v120 = vadd.f32 %v117, 1.0
    %v121 = vadd.f32 %v119, 1.0
    %v122 = vrcp.pop %v120
    %v123 = vmul.f32 %v120, %v122
    %v124 = vsub.f32 1.0, %v123
    %v125 = vmul.f32 %v122, %v124
    %v126 = vadd.f32 %v122, %v125
    %vm127 = vweird.f32 %v120
    %vm128 = vweird.f32 %v122
    %vm129 = vmor %vm127, %vm128
    %v130 = vsel %vm129, %v122, %v126
    %v131 = vand.u32 2147483647, %v120
    %vm132 = vcmp.eq.f32.partialorder %v131, 8.507059e+37
    %v133 = vand.u32 %v120, 2147483648
    %v134 = vor.u32 1.1754944e-38, %v133
    %v135 = vsel %vm132, %v134, %v130
    %v136 = vmul.f32 1.0, %v135
    %v137 = vrcp.pop %v121
    %v138 = vmul.f32 %v121, %v137
    %v139 = vsub.f32 1.0, %v138
    %v140 = vmul.f32 %v137, %v139
    %v141 = vadd.f32 %v137, %v140
    %vm142 = vweird.f32 %v121
    %vm143 = vweird.f32 %v137
    %vm144 = vmor %vm142, %vm143
    %v145 = vsel %vm144, %v137, %v141
    %v146 = vand.u32 2147483647, %v121
    %vm147 = vcmp.eq.f32.partialorder %v146, 8.507059e+37
    %v148 = vand.u32 %v121, 2147483648
    %v149 = vor.u32 1.1754944e-38, %v148
    %v150 = vsel %vm147, %v149, %v145
    %v151 = vmul.f32 1.0, %v150
    %s152 = sld [smem:[#allocation3 + $0x8]]
    %v153 = vstv %s152
    %v154 = vmul.f32 %v34, %v153
    %v155 = vmul.f32 %v35, %v153
    %s156 = sld [smem:[#allocation3 + $0x9]]
    %v157 = vstv %s156
    %v158 = vmul.f32 %v38, %v157
    %v159 = vmul.f32 %v39, %v157
    %v160 = vadd.f32 %v154, %v158
    %v161 = vadd.f32 %v155, %v159
    %s162 = sld [smem:[#allocation3 + $0xa]]
    %v163 = vstv %s162
    %v164 = vmul.f32 %v42, %v163
    %v165 = vmul.f32 %v43, %v163
    %v166 = vadd.f32 %v160, %v164
    %v167 = vadd.f32 %v161, %v165
    %s168 = sld [smem:[#allocation3 + $0xb]]
    %v169 = vstv %s168
    %v170 = vmul.f32 %v46, %v169
    %v171 = vmul.f32 %v47, %v169
    %v172 = vadd.f32 %v166, %v170
    %v173 = vadd.f32 %v167, %v171
    %s174 = sld [smem:[#allocation3 + $0xc]]
    %v175 = vstv %s174
    %v176 = vmul.f32 %v50, %v175
    %v177 = vmul.f32 %v51, %v175
    %v178 = vadd.f32 %v172, %v176
    %v179 = vadd.f32 %v173, %v177
    %s180 = sld [smem:[#allocation3 + $0xd]]
    %v181 = vstv %s180
    %v182 = vmul.f32 %v54, %v181
    %v183 = vmul.f32 %v55, %v181
    %v184 = vadd.f32 %v178, %v182
    %v185 = vadd.f32 %v179, %v183
    %s186 = sld [smem:[#allocation3 + $0xe]]
    %v187 = vstv %s186
    %v188 = vmul.f32 %v58, %v187
    %v189 = vmul.f32 %v59, %v187
    %v190 = vadd.f32 %v184, %v188
    %v191 = vadd.f32 %v185, %v189
    %s192 = sld [smem:[#allocation3 + $0xf]]
    %v193 = vstv %s192
    %v194 = vmul.f32 %v62, %v193
    %v195 = vmul.f32 %v63, %v193
    %v196 = vadd.f32 %v190, %v194
    %v197 = vadd.f32 %v191, %v195
    %s198 = sld [smem:[#allocation3 + $0x31]]
    %v199 = vstv %s198
    %v200 = vadd.f32 %v196, %v199
    %v201 = vadd.f32 %v197, %v199
    %v202 = vxor.u32 %v200, 2147483648
    %v203 = vxor.u32 %v201, 2147483648
    %v204 = vmul.f32 %v202, 1.442695
    %v205 = vpow.pop %v204
    %v206 = vmul.f32 %v203, 1.442695
    %v207 = vpow.pop %v206
    %v208 = vadd.f32 %v205, 1.0
    %v209 = vadd.f32 %v207, 1.0
    %v210 = vrcp.pop %v208
    %v211 = vmul.f32 %v208, %v210
    %v212 = vsub.f32 1.0, %v211
    %v213 = vmul.f32 %v210, %v212
    %v214 = vadd.f32 %v210, %v213
    %vm215 = vweird.f32 %v208
    %vm216 = vweird.f32 %v210
    %vm217 = vmor %vm215, %vm216
    %v218 = vsel %vm217, %v210, %v214
    %v219 = vand.u32 2147483647, %v208
    %vm220 = vcmp.eq.f32.partialorder %v219, 8.507059e+37
    %v221 = vand.u32 %v208, 2147483648
    %v222 = vor.u32 1.1754944e-38, %v221
    %v223 = vsel %vm220, %v222, %v218
    %v224 = vmul.f32 1.0, %v223
    %v225 = vrcp.pop %v209
    %v226 = vmul.f32 %v209, %v225
    %v227 = vsub.f32 1.0, %v226
    %v228 = vmul.f32 %v225, %v227
    %v229 = vadd.f32 %v225, %v228
    %vm230 = vweird.f32 %v209
    %vm231 = vweird.f32 %v225
    %vm232 = vmor %vm230, %vm231
    %v233 = vsel %vm232, %v225, %v229
    %v234 = vand.u32 2147483647, %v209
    %vm235 = vcmp.eq.f32.partialorder %v234, 8.507059e+37
    %v236 = vand.u32 %v209, 2147483648
    %v237 = vor.u32 1.1754944e-38, %v236
    %v238 = vsel %vm235, %v237, %v233
    %v239 = vmul.f32 1.0, %v238
    %s240 = sld [smem:[#allocation3 + $0x10]]
    %v241 = vstv %s240
    %v242 = vmul.f32 %v34, %v241
    %v243 = vmul.f32 %v35, %v241
    %s244 = sld [smem:[#allocation3 + $0x11]]
    %v245 = vstv %s244
    %v246 = vmul.f32 %v38, %v245
    %v247 = vmul.f32 %v39, %v245
    %v248 = vadd.f32 %v242, %v246
    %v249 = vadd.f32 %v243, %v247
    %s250 = sld [smem:[#allocation3 + $0x12]]
    %v251 = vstv %s250
    %v252 = vmul.f32 %v42, %v251
    %v253 = vmul.f32 %v43, %v251
    %v254 = vadd.f32 %v248, %v252
    %v255 = vadd.f32 %v249, %v253
    %s256 = sld [smem:[#allocation3 + $0x13]]
    %v257 = vstv %s256
    %v258 = vmul.f32 %v46, %v257
    %v259 = vmul.f32 %v47, %v257
    %v260 = vadd.f32 %v254, %v258
    %v261 = vadd.f32 %v255, %v259
    %s262 = sld [smem:[#allocation3 + $0x14]]
    %v263 = vstv %s262
    %v264 = vmul.f32 %v50, %v263
    %v265 = vmul.f32 %v51, %v263
    %v266 = vadd.f32 %v260, %v264
    %v267 = vadd.f32 %v261, %v265
    %s268 = sld [smem:[#allocation3 + $0x15]]
    %v269 = vstv %s268
    %v270 = vmul.f32 %v54, %v269
    %v271 = vmul.f32 %v55, %v269
    %v272 = vadd.f32 %v266, %v270
    %v273 = vadd.f32 %v267, %v271
    %s274 = sld [smem:[#allocation3 + $0x16]]
    %v275 = vstv %s274
    %v276 = vmul.f32 %v58, %v275
    %v277 = vmul.f32 %v59, %v275
    %v278 = vadd.f32 %v272, %v276
    %v279 = vadd.f32 %v273, %v277
    %s280 = sld [smem:[#allocation3 + $0x17]]
    %v281 = vstv %s280
    %v282 = vmul.f32 %v62, %v281
    %v283 = vmul.f32 %v63, %v281
    %v284 = vadd.f32 %v278, %v282
    %v285 = vadd.f32 %v279, %v283
    %s286 = sld [smem:[#allocation3 + $0x32]]
    %v287 = vstv %s286
    %v288 = vadd.f32 %v284, %v287
    %v289 = vadd.f32 %v285, %v287
    %v290 = vxor.u32 %v288, 2147483648
    %v291 = vxor.u32 %v289, 2147483648
    %v292 = vmul.f32 %v290, 1.442695
    %v293 = vpow.pop %v292
    %v294 = vmul.f32 %v291, 1.442695
    %v295 = vpow.pop %v294
    %v296 = vadd.f32 %v293, 1.0
    %v297 = vadd.f32 %v295, 1.0
    %v298 = vrcp.pop %v296
    %v299 = vmul.f32 %v296, %v298
    %v300 = vsub.f32 1.0, %v299
    %v301 = vmul.f32 %v298, %v300
    %v302 = vadd.f32 %v298, %v301
    %vm303 = vweird.f32 %v296
    %vm304 = vweird.f32 %v298
    %vm305 = vmor %vm303, %vm304
    %v306 = vsel %vm305, %v298, %v302
    %v307 = vand.u32 2147483647, %v296
    %vm308 = vcmp.eq.f32.partialorder %v307, 8.507059e+37
    %v309 = vand.u32 %v296, 2147483648
    %v310 = vor.u32 1.1754944e-38, %v309
    %v311 = vsel %vm308, %v310, %v306
    %v312 = vmul.f32 1.0, %v311
    %v313 = vrcp.pop %v297
    %v314 = vmul.f32 %v297, %v313
    %v315 = vsub.f32 1.0, %v314
    %v316 = vmul.f32 %v313, %v315
    %v317 = vadd.f32 %v313, %v316
    %vm318 = vweird.f32 %v297
    %vm319 = vweird.f32 %v313
    %vm320 = vmor %vm318, %vm319
    %v321 = vsel %vm320, %v313, %v317
    %v322 = vand.u32 2147483647, %v297
    %vm323 = vcmp.eq.f32.partialorder %v322, 8.507059e+37
    %v324 = vand.u32 %v297, 2147483648
    %v325 = vor.u32 1.1754944e-38, %v324
    %v326 = vsel %vm323, %v325, %v321
    %v327 = vmul.f32 1.0, %v326
    %s328 = sld [smem:[#allocation3 + $0x18]]
    %v329 = vstv %s328
    %v330 = vmul.f32 %v34, %v329
    %v331 = vmul.f32 %v35, %v329
    %s332 = sld [smem:[#allocation3 + $0x19]]
    %v333 = vstv %s332
    %v334 = vmul.f32 %v38, %v333
    %v335 = vmul.f32 %v39, %v333
    %v336 = vadd.f32 %v330, %v334
    %v337 = vadd.f32 %v331, %v335
    %s338 = sld [smem:[#allocation3 + $0x1a]]
    %v339 = vstv %s338
    %v340 = vmul.f32 %v42, %v339
    %v341 = vmul.f32 %v43, %v339
    %v342 = vadd.f32 %v336, %v340
    %v343 = vadd.f32 %v337, %v341
    %s344 = sld [smem:[#allocation3 + $0x1b]]
    %v345 = vstv %s344
    %v346 = vmul.f32 %v46, %v345
    %v347 = vmul.f32 %v47, %v345
    %v348 = vadd.f32 %v342, %v346
    %v349 = vadd.f32 %v343, %v347
    %s350 = sld [smem:[#allocation3 + $0x1c]]
    %v351 = vstv %s350
    %v352 = vmul.f32 %v50, %v351
    %v353 = vmul.f32 %v51, %v351
    %v354 = vadd.f32 %v348, %v352
    %v355 = vadd.f32 %v349, %v353
    %s356 = sld [smem:[#allocation3 + $0x1d]]
    %v357 = vstv %s356
    %v358 = vmul.f32 %v54, %v357
    %v359 = vmul.f32 %v55, %v357
    %v360 = vadd.f32 %v354, %v358
    %v361 = vadd.f32 %v355, %v359
    %s362 = sld [smem:[#allocation3 + $0x1e]]
    %v363 = vstv %s362
    %v364 = vmul.f32 %v58, %v363
    %v365 = vmul.f32 %v59, %v363
    %v366 = vadd.f32 %v360, %v364
    %v367 = vadd.f32 %v361, %v365
    %s368 = sld [smem:[#allocation3 + $0x1f]]
    %v369 = vstv %s368
    %v370 = vmul.f32 %v62, %v369
    %v371 = vmul.f32 %v63, %v369
    %v372 = vadd.f32 %v366, %v370
    %v373 = vadd.f32 %v367, %v371
    %s374 = sld [smem:[#allocation3 + $0x33]]
    %v375 = vstv %s374
    %v376 = vadd.f32 %v372, %v375
    %v377 = vadd.f32 %v373, %v375
    %v378 = vxor.u32 %v376, 2147483648
    %v379 = vxor.u32 %v377, 2147483648
    %v380 = vmul.f32 %v378, 1.442695
    %v381 = vpow.pop %v380
    %v382 = vmul.f32 %v379, 1.442695
    %v383 = vpow.pop %v382
    %v384 = vadd.f32 %v381, 1.0
    %v385 = vadd.f32 %v383, 1.0
    %v386 = vrcp.pop %v384
    %v387 = vmul.f32 %v384, %v386
    %v388 = vsub.f32 1.0, %v387
    %v389 = vmul.f32 %v386, %v388
    %v390 = vadd.f32 %v386, %v389
    %vm391 = vweird.f32 %v384
    %vm392 = vweird.f32 %v386
    %vm393 = vmor %vm391, %vm392
    %v394 = vsel %vm393, %v386, %v390
    %v395 = vand.u32 2147483647, %v384
    %vm396 = vcmp.eq.f32.partialorder %v395, 8.507059e+37
    %v397 = vand.u32 %v384, 2147483648
    %v398 = vor.u32 1.1754944e-38, %v397
    %v399 = vsel %vm396, %v398, %v394
    %v400 = vmul.f32 1.0, %v399
    %v401 = vrcp.pop %v385
    %v402 = vmul.f32 %v385, %v401
    %v403 = vsub.f32 1.0, %v402
    %v404 = vmul.f32 %v401, %v403
    %v405 = vadd.f32 %v401, %v404
    %vm406 = vweird.f32 %v385
    %vm407 = vweird.f32 %v401
    %vm408 = vmor %vm406, %vm407
    %v409 = vsel %vm408, %v401, %v405
    %v410 = vand.u32 2147483647, %v385
    %vm411 = vcmp.eq.f32.partialorder %v410, 8.507059e+37
    %v412 = vand.u32 %v385, 2147483648
    %v413 = vor.u32 1.1754944e-38, %v412
    %v414 = vsel %vm411, %v413, %v409
    %v415 = vmul.f32 1.0, %v414
    %s416 = sld [smem:[#allocation3 + $0x20]]
    %v417 = vstv %s416
    %v418 = vmul.f32 %v34, %v417
    %v419 = vmul.f32 %v35, %v417
    %s420 = sld [smem:[#allocation3 + $0x21]]
    %v421 = vstv %s420
    %v422 = vmul.f32 %v38, %v421
    %v423 = vmul.f32 %v39, %v421
    %v424 = vadd.f32 %v418, %v422
    %v425 = vadd.f32 %v419, %v423
    %s426 = sld [smem:[#allocation3 + $0x22]]
    %v427 = vstv %s426
    %v428 = vmul.f32 %v42, %v427
    %v429 = vmul.f32 %v43, %v427
    %v430 = vadd.f32 %v424, %v428
    %v431 = vadd.f32 %v425, %v429
    %s432 = sld [smem:[#allocation3 + $0x23]]
    %v433 = vstv %s432
    %v434 = vmul.f32 %v46, %v433
    %v435 = vmul.f32 %v47, %v433
    %v436 = vadd.f32 %v430, %v434
    %v437 = vadd.f32 %v431, %v435
    %s438 = sld [smem:[#allocation3 + $0x24]]
    %v439 = vstv %s438
    %v440 = vmul.f32 %v50, %v439
    %v441 = vmul.f32 %v51, %v439
    %v442 = vadd.f32 %v436, %v440
    %v443 = vadd.f32 %v437, %v441
    %s444 = sld [smem:[#allocation3 + $0x25]]
    %v445 = vstv %s444
    %v446 = vmul.f32 %v54, %v445
    %v447 = vmul.f32 %v55, %v445
    %v448 = vadd.f32 %v442, %v446
    %v449 = vadd.f32 %v443, %v447
    %s450 = sld [smem:[#allocation3 + $0x26]]
    %v451 = vstv %s450
    %v452 = vmul.f32 %v58, %v451
    %v453 = vmul.f32 %v59, %v451
    %v454 = vadd.f32 %v448, %v452
    %v455 = vadd.f32 %v449, %v453
    %s456 = sld [smem:[#allocation3 + $0x27]]
    %v457 = vstv %s456
    %v458 = vmul.f32 %v62, %v457
    %v459 = vmul.f32 %v63, %v457
    %v460 = vadd.f32 %v454, %v458
    %v461 = vadd.f32 %v455, %v459
    %s462 = sld [smem:[#allocation3 + $0x34]]
    %v463 = vstv %s462
    %v464 = vadd.f32 %v460, %v463
    %v465 = vadd.f32 %v461, %v463
    %v466 = vxor.u32 %v464, 2147483648
    %v467 = vxor.u32 %v465, 2147483648
    %v468 = vmul.f32 %v466, 1.442695
    %v469 = vpow.pop %v468
    %v470 = vmul.f32 %v467, 1.442695
    %v471 = vpow.pop %v470
    %v472 = vadd.f32 %v469, 1.0
    %v473 = vadd.f32 %v471, 1.0
    %v474 = vrcp.pop %v472
    %v475 = vmul.f32 %v472, %v474
    %v476 = vsub.f32 1.0, %v475
    %v477 = vmul.f32 %v474, %v476
    %v478 = vadd.f32 %v474, %v477
    %vm479 = vweird.f32 %v472
    %vm480 = vweird.f32 %v474
    %vm481 = vmor %vm479, %vm480
    %v482 = vsel %vm481, %v474, %v478
    %v483 = vand.u32 2147483647, %v472
    %vm484 = vcmp.eq.f32.partialorder %v483, 8.507059e+37
    %v485 = vand.u32 %v472, 2147483648
    %v486 = vor.u32 1.1754944e-38, %v485
    %v487 = vsel %vm484, %v486, %v482
    %v488 = vmul.f32 1.0, %v487
    %v489 = vrcp.pop %v473
    %v490 = vmul.f32 %v473, %v489
    %v491 = vsub.f32 1.0, %v490
    %v492 = vmul.f32 %v489, %v491
    %v493 = vadd.f32 %v489, %v492
    %vm494 = vweird.f32 %v473
    %vm495 = vweird.f32 %v489
    %vm496 = vmor %vm494, %vm495
    %v497 = vsel %vm496, %v489, %v493
    %v498 = vand.u32 2147483647, %v473
    %vm499 = vcmp.eq.f32.partialorder %v498, 8.507059e+37
    %v500 = vand.u32 %v473, 2147483648
    %v501 = vor.u32 1.1754944e-38, %v500
    %v502 = vsel %vm499, %v501, %v497
    %v503 = vmul.f32 1.0, %v502
    %s504 = sld [smem:[#allocation3 + $0x28]]
    %v505 = vstv %s504
    %v506 = vmul.f32 %v34, %v505
    %v507 = vmul.f32 %v35, %v505
    %s508 = sld [smem:[#allocation3 + $0x29]]
    %v509 = vstv %s508
    %v510 = vmul.f32 %v38, %v509
    %v511 = vmul.f32 %v39, %v509
    %v512 = vadd.f32 %v506, %v510
    %v513 = vadd.f32 %v507, %v511
    %s514 = sld [smem:[#allocation3 + $0x2a]]
    %v515 = vstv %s514
    %v516 = vmul.f32 %v42, %v515
    %v517 = vmul.f32 %v43, %v515
    %v518 = vadd.f32 %v512, %v516
    %v519 = vadd.f32 %v513, %v517
    %s520 = sld [smem:[#allocation3 + $0x2b]]
    %v521 = vstv %s520
    %v522 = vmul.f32 %v46, %v521
    %v523 = vmul.f32 %v47, %v521
    %v524 = vadd.f32 %v518, %v522
    %v525 = vadd.f32 %v519, %v523
    %s526 = sld [smem:[#allocation3 + $0x2c]]
    %v527 = vstv %s526
    %v528 = vmul.f32 %v50, %v527
    %v529 = vmul.f32 %v51, %v527
    %v530 = vadd.f32 %v524, %v528
    %v531 = vadd.f32 %v525, %v529
    %s532 = sld [smem:[#allocation3 + $0x2d]]
    %v533 = vstv %s532
    %v534 = vmul.f32 %v54, %v533
    %v535 = vmul.f32 %v55, %v533
    %v536 = vadd.f32 %v530, %v534
    %v537 = vadd.f32 %v531, %v535
    %s538 = sld [smem:[#allocation3 + $0x2e]]
    %v539 = vstv %s538
    %v540 = vmul.f32 %v58, %v539
    %v541 = vmul.f32 %v59, %v539
    %v542 = vadd.f32 %v536, %v540
    %v543 = vadd.f32 %v537, %v541
    %s544 = sld [smem:[#allocation3 + $0x2f]]
    %v545 = vstv %s544
    %v546 = vmul.f32 %v62, %v545
    %v547 = vmul.f32 %v63, %v545
    %v548 = vadd.f32 %v542, %v546
    %v549 = vadd.f32 %v543, %v547
    %s550 = sld [smem:[#allocation3 + $0x35]]
    %v551 = vstv %s550
    %v552 = vadd.f32 %v548, %v551
    %v553 = vadd.f32 %v549, %v551
    %v554 = vxor.u32 %v552, 2147483648
    %v555 = vxor.u32 %v553, 2147483648
    %v556 = vmul.f32 %v554, 1.442695
    %v557 = vpow.pop %v556
    %v558 = vmul.f32 %v555, 1.442695
    %v559 = vpow.pop %v558
    %v560 = vadd.f32 %v557, 1.0
    %v561 = vadd.f32 %v559, 1.0
    %v562 = vrcp.pop %v560
    %v563 = vmul.f32 %v560, %v562
    %v564 = vsub.f32 1.0, %v563
    %v565 = vmul.f32 %v562, %v564
    %v566 = vadd.f32 %v562, %v565
    %vm567 = vweird.f32 %v560
    %vm568 = vweird.f32 %v562
    %vm569 = vmor %vm567, %vm568
    %v570 = vsel %vm569, %v562, %v566
    %v571 = vand.u32 2147483647, %v560
    %vm572 = vcmp.eq.f32.partialorder %v571, 8.507059e+37
    %v573 = vand.u32 %v560, 2147483648
    %v574 = vor.u32 1.1754944e-38, %v573
    %v575 = vsel %vm572, %v574, %v570
    %v576 = vmul.f32 1.0, %v575
    %v577 = vrcp.pop %v561
    %v578 = vmul.f32 %v561, %v577
    %v579 = vsub.f32 1.0, %v578
    %v580 = vmul.f32 %v577, %v579
    %v581 = vadd.f32 %v577, %v580
    %vm582 = vweird.f32 %v561
    %vm583 = vweird.f32 %v577
    %vm584 = vmor %vm582, %vm583
    %v585 = vsel %vm584, %v577, %v581
    %v586 = vand.u32 2147483647, %v561
    %vm587 = vcmp.eq.f32.partialorder %v586, 8.507059e+37
    %v588 = vand.u32 %v561, 2147483648
    %v589 = vor.u32 1.1754944e-38, %v588
    %v590 = vsel %vm587, %v589, %v585
    %v591 = vmul.f32 1.0, %v590
    %s592 = sld [smem:[#allocation3 + $0x36]]
    %v593 = vstv %s592
    %v594 = vmul.f32 %v136, %v593
    %v595 = vmul.f32 %v151, %v593
    %s596 = sld [smem:[#allocation3 + $0x37]]
    %v597 = vstv %s596
    %v598 = vmul.f32 %v224, %v597
    %v599 = vmul.f32 %v239, %v597
    %v600 = vadd.f32 %v594, %v598
    %v601 = vadd.f32 %v595, %v599
    %s602 = sld [smem:[#allocation3 + $0x38]]
    %v603 = vstv %s602
    %v604 = vmul.f32 %v312, %v603
    %v605 = vmul.f32 %v327, %v603
    %v606 = vadd.f32 %v600, %v604
    %v607 = vadd.f32 %v601, %v605
    %s608 = sld [smem:[#allocation3 + $0x39]]
    %v609 = vstv %s608
    %v610 = vmul.f32 %v400, %v609
    %v611 = vmul.f32 %v415, %v609
    %v612 = vadd.f32 %v606, %v610
    %v613 = vadd.f32 %v607, %v611
    %s614 = sld [smem:[#allocation3 + $0x3a]]
    %v615 = vstv %s614
    %v616 = vmul.f32 %v488, %v615
    %v617 = vmul.f32 %v503, %v615
    %v618 = vadd.f32 %v612, %v616
    %v619 = vadd.f32 %v613, %v617
    %s620 = sld [smem:[#allocation3 + $0x3b]]
    %v621 = vstv %s620
    %v622 = vmul.f32 %v576, %v621
    %v623 = vmul.f32 %v591, %v621
    %v624 = vadd.f32 %v618, %v622
    %v625 = vadd.f32 %v619, %v623
    %s626 = sld [smem:[#allocation3 + $0x4e]]
    %v627 = vstv %s626
    %v628 = vadd.f32 %v624, %v627
    %v629 = vadd.f32 %v625, %v627
    %v630 = vxor.u32 %v628, 2147483648
    %v631 = vxor.u32 %v629, 2147483648
    %v632 = vmul.f32 %v630, 1.442695
    %v633 = vpow.pop %v632
    %v634 = vmul.f32 %v631, 1.442695
    %v635 = vpow.pop %v634
    %v636 = vadd.f32 %v633, 1.0
    %v637 = vadd.f32 %v635, 1.0
    %v638 = vrcp.pop %v636
    %v639 = vmul.f32 %v636, %v638
    %v640 = vsub.f32 1.0, %v639
    %v641 = vmul.f32 %v638, %v640
    %v642 = vadd.f32 %v638, %v641
    %vm643 = vweird.f32 %v636
    %vm644 = vweird.f32 %v638
    %vm645 = vmor %vm643, %vm644
    %v646 = vsel %vm645, %v638, %v642
    %v647 = vand.u32 2147483647, %v636
    %vm648 = vcmp.eq.f32.partialorder %v647, 8.507059e+37
    %v649 = vand.u32 %v636, 2147483648
    %v650 = vor.u32 1.1754944e-38, %v649
    %v651 = vsel %vm648, %v650, %v646
    %v652 = vmul.f32 1.0, %v651
    %v653 = vrcp.pop %v637
    %v654 = vmul.f32 %v637, %v653
    %v655 = vsub.f32 1.0, %v654
    %v656 = vmul.f32 %v653, %v655
    %v657 = vadd.f32 %v653, %v656
    %vm658 = vweird.f32 %v637
    %vm659 = vweird.f32 %v653
    %vm660 = vmor %vm658, %vm659
    %v661 = vsel %vm660, %v653, %v657
    %v662 = vand.u32 2147483647, %v637
    %vm663 = vcmp.eq.f32.partialorder %v662, 8.507059e+37
    %v664 = vand.u32 %v637, 2147483648
    %v665 = vor.u32 1.1754944e-38, %v664
    %v666 = vsel %vm663, %v665, %v661
    %v667 = vmul.f32 1.0, %v666
    %s668 = sld [smem:[#allocation3 + $0x3c]]
    %v669 = vstv %s668
    %v670 = vmul.f32 %v136, %v669
    %v671 = vmul.f32 %v151, %v669
    %s672 = sld [smem:[#allocation3 + $0x3d]]
    %v673 = vstv %s672
    %v674 = vmul.f32 %v224, %v673
    %v675 = vmul.f32 %v239, %v673
    %v676 = vadd.f32 %v670, %v674
    %v677 = vadd.f32 %v671, %v675
    %s678 = sld [smem:[#allocation3 + $0x3e]]
    %v679 = vstv %s678
    %v680 = vmul.f32 %v312, %v679
    %v681 = vmul.f32 %v327, %v679
    %v682 = vadd.f32 %v676, %v680
    %v683 = vadd.f32 %v677, %v681
    %s684 = sld [smem:[#allocation3 + $0x3f]]
    %v685 = vstv %s684
    %v686 = vmul.f32 %v400, %v685
    %v687 = vmul.f32 %v415, %v685
    %v688 = vadd.f32 %v682, %v686
    %v689 = vadd.f32 %v683, %v687
    %s690 = sld [smem:[#allocation3 + $0x40]]
    %v691 = vstv %s690
    %v692 = vmul.f32 %v488, %v691
    %v693 = vmul.f32 %v503, %v691
    %v694 = vadd.f32 %v688, %v692
    %v695 = vadd.f32 %v689, %v693
    %s696 = sld [smem:[#allocation3 + $0x41]]
    %v697 = vstv %s696
    %v698 = vmul.f32 %v576, %v697
    %v699 = vmul.f32 %v591, %v697
    %v700 = vadd.f32 %v694, %v698
    %v701 = vadd.f32 %v695, %v699
    %s702 = sld [smem:[#allocation3 + $0x4f]]
    %v703 = vstv %s702
    %v704 = vadd.f32 %v700, %v703
    %v705 = vadd.f32 %v701, %v703
    %v706 = vxor.u32 %v704, 2147483648
    %v707 = vxor.u32 %v705, 2147483648
    %v708 = vmul.f32 %v706, 1.442695
    %v709 = vpow.pop %v708
    %v710 = vmul.f32 %v707, 1.442695
    %v711 = vpow.pop %v710
    %v712 = vadd.f32 %v709, 1.0
    %v713 = vadd.f32 %v711, 1.0
    %v714 = vrcp.pop %v712
    %v715 = vmul.f32 %v712, %v714
    %v716 = vsub.f32 1.0, %v715
    %v717 = vmul.f32 %v714, %v716
    %v718 = vadd.f32 %v714, %v717
    %vm719 = vweird.f32 %v712
    %vm720 = vweird.f32 %v714
    %vm721 = vmor %vm719, %vm720
    %v722 = vsel %vm721, %v714, %v718
    %v723 = vand.u32 2147483647, %v712
    %vm724 = vcmp.eq.f32.partialorder %v723, 8.507059e+37
    %v725 = vand.u32 %v712, 2147483648
    %v726 = vor.u32 1.1754944e-38, %v725
    %v727 = vsel %vm724, %v726, %v722
    %v728 = vmul.f32 1.0, %v727
    %v729 = vrcp.pop %v713
    %v730 = vmul.f32 %v713, %v729
    %v731 = vsub.f32 1.0, %v730
    %v732 = vmul.f32 %v729, %v731
    %v733 = vadd.f32 %v729, %v732
    %vm734 = vweird.f32 %v713
    %vm735 = vweird.f32 %v729
    %vm736 = vmor %vm734, %vm735
    %v737 = vsel %vm736, %v729, %v733
    %v738 = vand.u32 2147483647, %v713
    %vm739 = vcmp.eq.f32.partialorder %v738, 8.507059e+37
    %v740 = vand.u32 %v713, 2147483648
    %v741 = vor.u32 1.1754944e-38, %v740
    %v742 = vsel %vm739, %v741, %v737
    %v743 = vmul.f32 1.0, %v742
    %s744 = sld [smem:[#allocation3 + $0x42]]
    %v745 = vstv %s744
    %v746 = vmul.f32 %v136, %v745
    %v747 = vmul.f32 %v151, %v745
    %s748 = sld [smem:[#allocation3 + $0x43]]
    %v749 = vstv %s748
    %v750 = vmul.f32 %v224, %v749
    %v751 = vmul.f32 %v239, %v749
    %v752 = vadd.f32 %v746, %v750
    %v753 = vadd.f32 %v747, %v751
    %s754 = sld [smem:[#allocation3 + $0x44]]
    %v755 = vstv %s754
    %v756 = vmul.f32 %v312, %v755
    %v757 = vmul.f32 %v327, %v755
    %v758 = vadd.f32 %v752, %v756
    %v759 = vadd.f32 %v753, %v757
    %s760 = sld [smem:[#allocation3 + $0x45]]
    %v761 = vstv %s760
    %v762 = vmul.f32 %v400, %v761
    %v763 = vmul.f32 %v415, %v761
    %v764 = vadd.f32 %v758, %v762
    %v765 = vadd.f32 %v759, %v763
    %s766 = sld [smem:[#allocation3 + $0x46]]
    %v767 = vstv %s766
    %v768 = vmul.f32 %v488, %v767
    %v769 = vmul.f32 %v503, %v767
    %v770 = vadd.f32 %v764, %v768
    %v771 = vadd.f32 %v765, %v769
    %s772 = sld [smem:[#allocation3 + $0x47]]
    %v773 = vstv %s772
    %v774 = vmul.f32 %v576, %v773
    %v775 = vmul.f32 %v591, %v773
    %v776 = vadd.f32 %v770, %v774
    %v777 = vadd.f32 %v771, %v775
    %s778 = sld [smem:[#allocation3 + $0x50]]
    %v779 = vstv %s778
    %v780 = vadd.f32 %v776, %v779
    %v781 = vadd.f32 %v777, %v779
    %v782 = vxor.u32 %v780, 2147483648
    %v783 = vxor.u32 %v781, 2147483648
    %v784 = vmul.f32 %v782, 1.442695
    %v785 = vpow.pop %v784
    %v786 = vmul.f32 %v783, 1.442695
    %v787 = vpow.pop %v786
    %v788 = vadd.f32 %v785, 1.0
    %v789 = vadd.f32 %v787, 1.0
    %v790 = vrcp.pop %v788
    %v791 = vmul.f32 %v788, %v790
    %v792 = vsub.f32 1.0, %v791
    %v793 = vmul.f32 %v790, %v792
    %v794 = vadd.f32 %v790, %v793
    %vm795 = vweird.f32 %v788
    %vm796 = vweird.f32 %v790
    %vm797 = vmor %vm795, %vm796
    %v798 = vsel %vm797, %v790, %v794
    %v799 = vand.u32 2147483647, %v788
    %vm800 = vcmp.eq.f32.partialorder %v799, 8.507059e+37
    %v801 = vand.u32 %v788, 2147483648
    %v802 = vor.u32 1.1754944e-38, %v801
    %v803 = vsel %vm800, %v802, %v798
    %v804 = vmul.f32 1.0, %v803
    %v805 = vrcp.pop %v789
    %v806 = vmul.f32 %v789, %v805
    %v807 = vsub.f32 1.0, %v806
    %v808 = vmul.f32 %v805, %v807
    %v809 = vadd.f32 %v805, %v808
    %vm810 = vweird.f32 %v789
    %vm811 = vweird.f32 %v805
    %vm812 = vmor %vm810, %vm811
    %v813 = vsel %vm812, %v805, %v809
    %v814 = vand.u32 2147483647, %v789
    %vm815 = vcmp.eq.f32.partialorder %v814, 8.507059e+37
    %v816 = vand.u32 %v789, 2147483648
    %v817 = vor.u32 1.1754944e-38, %v816
    %v818 = vsel %vm815, %v817, %v813
    %v819 = vmul.f32 1.0, %v818
    %s820 = sld [smem:[#allocation3 + $0x48]]
    %v821 = vstv %s820
    %v822 = vmul.f32 %v136, %v821
    %v823 = vmul.f32 %v151, %v821
    %s824 = sld [smem:[#allocation3 + $0x49]]
    %v825 = vstv %s824
    %v826 = vmul.f32 %v224, %v825
    %v827 = vmul.f32 %v239, %v825
    %v828 = vadd.f32 %v822, %v826
    %v829 = vadd.f32 %v823, %v827
    %s830 = sld [smem:[#allocation3 + $0x4a]]
    %v831 = vstv %s830
    %v832 = vmul.f32 %v312, %v831
    %v833 = vmul.f32 %v327, %v831
    %v834 = vadd.f32 %v828, %v832
    %v835 = vadd.f32 %v829, %v833
    %s836 = sld [smem:[#allocation3 + $0x4b]]
    %v837 = vstv %s836
    %v838 = vmul.f32 %v400, %v837
    %v839 = vmul.f32 %v415, %v837
    %v840 = vadd.f32 %v834, %v838
    %v841 = vadd.f32 %v835, %v839
    %s842 = sld [smem:[#allocation3 + $0x4c]]
    %v843 = vstv %s842
    %v844 = vmul.f32 %v488, %v843
    %v845 = vmul.f32 %v503, %v843
    %v846 = vadd.f32 %v840, %v844
    %v847 = vadd.f32 %v841, %v845
    %s848 = sld [smem:[#allocation3 + $0x4d]]
    %v849 = vstv %s848
    %v850 = vmul.f32 %v576, %v849
    %v851 = vmul.f32 %v591, %v849
    %v852 = vadd.f32 %v846, %v850
    %v853 = vadd.f32 %v847, %v851
    %s854 = sld [smem:[#allocation3 + $0x51]]
    %v855 = vstv %s854
    %v856 = vadd.f32 %v852, %v855
    %v857 = vadd.f32 %v853, %v855
    %v858 = vxor.u32 %v856, 2147483648
    %v859 = vxor.u32 %v857, 2147483648
    %v860 = vmul.f32 %v858, 1.442695
    %v861 = vpow.pop %v860
    %v862 = vmul.f32 %v859, 1.442695
    %v863 = vpow.pop %v862
    %v864 = vadd.f32 %v861, 1.0
    %v865 = vadd.f32 %v863, 1.0
    %v866 = vrcp.pop %v864
    %v867 = vmul.f32 %v864, %v866
    %v868 = vsub.f32 1.0, %v867
    %v869 = vmul.f32 %v866, %v868
    %v870 = vadd.f32 %v866, %v869
    %vm871 = vweird.f32 %v864
    %vm872 = vweird.f32 %v866
    %vm873 = vmor %vm871, %vm872
    %v874 = vsel %vm873, %v866, %v870
    %v875 = vand.u32 2147483647, %v864
    %vm876 = vcmp.eq.f32.partialorder %v875, 8.507059e+37
    %v877 = vand.u32 %v864, 2147483648
    %v878 = vor.u32 1.1754944e-38, %v877
    %v879 = vsel %vm876, %v878, %v874
    %v880 = vmul.f32 1.0, %v879
    %v881 = vrcp.pop %v865
    %v882 = vmul.f32 %v865, %v881
    %v883 = vsub.f32 1.0, %v882
    %v884 = vmul.f32 %v881, %v883
    %v885 = vadd.f32 %v881, %v884
    %vm886 = vweird.f32 %v865
    %vm887 = vweird.f32 %v881
    %vm888 = vmor %vm886, %vm887
    %v889 = vsel %vm888, %v881, %v885
    %v890 = vand.u32 2147483647, %v865
    %vm891 = vcmp.eq.f32.partialorder %v890, 8.507059e+37
    %v892 = vand.u32 %v865, 2147483648
    %v893 = vor.u32 1.1754944e-38, %v892
    %v894 = vsel %vm891, %v893, %v889
    %v895 = vmul.f32 1.0, %v894
    %s896 = sld [smem:[#allocation3 + $0x52]]
    %v897 = vstv %s896
    %v898 = vmul.f32 %v652, %v897
    %v899 = vmul.f32 %v667, %v897
    %s900 = sld [smem:[#allocation3 + $0x53]]
    %v901 = vstv %s900
    %v902 = vmul.f32 %v728, %v901
    %v903 = vmul.f32 %v743, %v901
    %v904 = vadd.f32 %v898, %v902
    %v905 = vadd.f32 %v899, %v903
    %s906 = sld [smem:[#allocation3 + $0x54]]
    %v907 = vstv %s906
    %v908 = vmul.f32 %v804, %v907
    %v909 = vmul.f32 %v819, %v907
    %v910 = vadd.f32 %v904, %v908
    %v911 = vadd.f32 %v905, %v909
    %s912 = sld [smem:[#allocation3 + $0x55]]
    %v913 = vstv %s912
    %v914 = vmul.f32 %v880, %v913
    %v915 = vmul.f32 %v895, %v913
    %v916 = vadd.f32 %v910, %v914
    %v917 = vadd.f32 %v911, %v915
    %s918 = sld [smem:[#allocation3 + $0x5a]]
    %v919 = vstv %s918
    %v920 = vadd.f32 %v916, %v919
    %v921 = vadd.f32 %v917, %v919
    %v922 = vxor.u32 %v920, 2147483648
    %v923 = vxor.u32 %v921, 2147483648
    %v924 = vmul.f32 %v922, 1.442695
    %v925 = vpow.pop %v924
    %v926 = vmul.f32 %v923, 1.442695
    %v927 = vpow.pop %v926
    %v928 = vadd.f32 %v925, 1.0
    %v929 = vadd.f32 %v927, 1.0
    %v930 = vrcp.pop %v928
    %v931 = vmul.f32 %v928, %v930
    %v932 = vsub.f32 1.0, %v931
    %v933 = vmul.f32 %v930, %v932
    %v934 = vadd.f32 %v930, %v933
    %vm935 = vweird.f32 %v928
    %vm936 = vweird.f32 %v930
    %vm937 = vmor %vm935, %vm936
    %v938 = vsel %vm937, %v930, %v934
    %v939 = vand.u32 2147483647, %v928
    %vm940 = vcmp.eq.f32.partialorder %v939, 8.507059e+37
    %v941 = vand.u32 %v928, 2147483648
    %v942 = vor.u32 1.1754944e-38, %v941
    %v943 = vsel %vm940, %v942, %v938
    %v944 = vmul.f32 1.0, %v943
    %v945 = vrcp.pop %v929
    %v946 = vmul.f32 %v929, %v945
    %v947 = vsub.f32 1.0, %v946
    %v948 = vmul.f32 %v945, %v947
    %v949 = vadd.f32 %v945, %v948
    %vm950 = vweird.f32 %v929
    %vm951 = vweird.f32 %v945
    %vm952 = vmor %vm950, %vm951
    %v953 = vsel %vm952, %v945, %v949
    %v954 = vand.u32 2147483647, %v929
    %vm955 = vcmp.eq.f32.partialorder %v954, 8.507059e+37
    %v956 = vand.u32 %v929, 2147483648
    %v957 = vor.u32 1.1754944e-38, %v956
    %v958 = vsel %vm955, %v957, %v953
    %v959 = vmul.f32 1.0, %v958
    %s960 = sld [smem:[#allocation3 + $0x56]]
    %v961 = vstv %s960
    %v962 = vmul.f32 %v652, %v961
    %v963 = vmul.f32 %v667, %v961
    %s964 = sld [smem:[#allocation3 + $0x57]]
    %v965 = vstv %s964
    %v966 = vmul.f32 %v728, %v965
    %v967 = vmul.f32 %v743, %v965
    %v968 = vadd.f32 %v962, %v966
    %v969 = vadd.f32 %v963, %v967
    %s970 = sld [smem:[#allocation3 + $0x58]]
    %v971 = vstv %s970
    %v972 = vmul.f32 %v804, %v971
    %v973 = vmul.f32 %v819, %v971
    %v974 = vadd.f32 %v968, %v972
    %v975 = vadd.f32 %v969, %v973
    %s976 = sld [smem:[#allocation3 + $0x59]]
    %v977 = vstv %s976
    %v978 = vmul.f32 %v880, %v977
    %v979 = vmul.f32 %v895, %v977
    %v980 = vadd.f32 %v974, %v978
    %v981 = vadd.f32 %v975, %v979
    %s982 = sld [smem:[#allocation3 + $0x5b]]
    %v983 = vstv %s982
    %v984 = vadd.f32 %v980, %v983
    %v985 = vadd.f32 %v981, %v983
    %v986 = vxor.u32 %v984, 2147483648
    %v987 = vxor.u32 %v985, 2147483648
    %v988 = vmul.f32 %v986, 1.442695
    %v989 = vpow.pop %v988
    %v990 = vmul.f32 %v987, 1.442695
    %v991 = vpow.pop %v990
    %v992 = vadd.f32 %v989, 1.0
    %v993 = vadd.f32 %v991, 1.0
    %v994 = vrcp.pop %v992
    %v995 = vmul.f32 %v992, %v994
    %v996 = vsub.f32 1.0, %v995
    %v997 = vmul.f32 %v994, %v996
    %v998 = vadd.f32 %v994, %v997
    %vm999 = vweird.f32 %v992
    %vm1000 = vweird.f32 %v994
    %vm1001 = vmor %vm999, %vm1000
    %v1002 = vsel %vm1001, %v994, %v998
    %v1003 = vand.u32 2147483647, %v992
    %vm1004 = vcmp.eq.f32.partialorder %v1003, 8.507059e+37
    %v1005 = vand.u32 %v992, 2147483648
    %v1006 = vor.u32 1.1754944e-38, %v1005
    %v1007 = vsel %vm1004, %v1006, %v1002
    %v1008 = vmul.f32 1.0, %v1007
    %v1009 = vrcp.pop %v993
    %v1010 = vmul.f32 %v993, %v1009
    %v1011 = vsub.f32 1.0, %v1010
    %v1012 = vmul.f32 %v1009, %v1011
    %v1013 = vadd.f32 %v1009, %v1012
    %vm1014 = vweird.f32 %v993
    %vm1015 = vweird.f32 %v1009
    %vm1016 = vmor %vm1014, %vm1015
    %v1017 = vsel %vm1016, %v1009, %v1013
    %v1018 = vand.u32 2147483647, %v993
    %vm1019 = vcmp.eq.f32.partialorder %v1018, 8.507059e+37
    %v1020 = vand.u32 %v993, 2147483648
    %v1021 = vor.u32 1.1754944e-38, %v1020
    %v1022 = vsel %vm1019, %v1021, %v1017
    %v1023 = vmul.f32 1.0, %v1022
    %s1024 = sld [smem:[#allocation3 + $0x5c]]
    %v1025 = vstv %s1024
    %v1026 = vmul.f32 %v944, %v1025
    %v1027 = vmul.f32 %v959, %v1025
    %s1028 = sld [smem:[#allocation3 + $0x5d]]
    %v1029 = vstv %s1028
    %v1030 = vmul.f32 %v1008, %v1029
    %v1031 = vmul.f32 %v1023, %v1029
    %v1032 = vadd.f32 %v1026, %v1030
    %v1033 = vadd.f32 %v1027, %v1031
    %s1034 = sld [smem:[#allocation3 + $0x5e]]
    %v1035 = vstv %s1034
    %v1036 = vadd.f32 %v1032, %v1035
    %v1037 = vadd.f32 %v1033, %v1035
    %v1038 = vxor.u32 %v1036, 2147483648
    %v1039 = vxor.u32 %v1037, 2147483648
    %v1040 = vmul.f32 %v1038, 1.442695
    %v1041 = vpow.pop %v1040
    %v1042 = vmul.f32 %v1039, 1.442695
    %v1043 = vpow.pop %v1042
    %v1044 = vadd.f32 %v1041, 1.0
    %v1045 = vadd.f32 %v1043, 1.0
    %v1046 = vrcp.pop %v1044
    %v1047 = vmul.f32 %v1044, %v1046
    %v1048 = vsub.f32 1.0, %v1047
    %v1049 = vmul.f32 %v1046, %v1048
    %v1050 = vadd.f32 %v1046, %v1049
    %vm1051 = vweird.f32 %v1044
    %vm1052 = vweird.f32 %v1046
    %vm1053 = vmor %vm1051, %vm1052
    %v1054 = vsel %vm1053, %v1046, %v1050
    %v1055 = vand.u32 2147483647, %v1044
    %vm1056 = vcmp.eq.f32.partialorder %v1055, 8.507059e+37
    %v1057 = vand.u32 %v1044, 2147483648
    %v1058 = vor.u32 1.1754944e-38, %v1057
    %v1059 = vsel %vm1056, %v1058, %v1054
    %v1060 = vmul.f32 1.0, %v1059
    %v1061 = vrcp.pop %v1045
    %v1062 = vmul.f32 %v1045, %v1061
    %v1063 = vsub.f32 1.0, %v1062
    %v1064 = vmul.f32 %v1061, %v1063
    %v1065 = vadd.f32 %v1061, %v1064
    %vm1066 = vweird.f32 %v1045
    %vm1067 = vweird.f32 %v1061
    %vm1068 = vmor %vm1066, %vm1067
    %v1069 = vsel %vm1068, %v1061, %v1065
    %v1070 = vand.u32 2147483647, %v1045
    %vm1071 = vcmp.eq.f32.partialorder %v1070, 8.507059e+37
    %v1072 = vand.u32 %v1045, 2147483648
    %v1073 = vor.u32 1.1754944e-38, %v1072
    %v1074 = vsel %vm1071, %v1073, %v1069
    %v1075 = vmul.f32 1.0, %v1074
    %1076 = vst [vmem:[#allocation7] sm:$0xff] %v1060
    %1077 = vst [vmem:[#allocation7 + $0x8] sm:$0xff] %v1075
    // Predicated region
    $region10: #{tpu_custom_call.1} parent=1 // pred_check
      _
    $region11: #{tpu_custom_call.1} parent=1 // pred_check_branch
      %1079 = sbr.rel (0) target = $region13
    $region12: #{tpu_custom_call.1} parent=1 // pred_region
      %1081 = vsyncadd [#allocation6], 0
      %s1082 = sshll.u32 [#allocation7], 4
      %s1083 = int_to_ptr.vmem [resolvable:$true] %s1082
      %s1084 = sshll.u32 %s2, 4
      %s1085 = int_to_ptr.hbm [resolvable:$true] %s1084
      %1090 = dma.vmem_to_hbm [thread:$0]  %s1083, 256, %s1085, [#allocation6], 128, 128, 8
    $region13: #{tpu_custom_call.1} parent=1 // pred_fallthru
      _
    // Predicated region
    $region14: #{tpu_custom_call.1} parent=1 // pred_check
      _
    $region15: #{tpu_custom_call.1} parent=1 // pred_check_branch
      %1092 = sbr.rel (0) target = $region17
    $region16: #{tpu_custom_call.1} parent=1 // pred_region
      %1094 = dma.done [#allocation6], 256
    $region17: #{tpu_custom_call.1} parent=1 // pred_fallthru
      _
    %1095 = vsyncpa [#allocation5], 1
    %1096 = vsyncpa [#allocation6], 1

</llo_original>
